<compile_context>
chip_gen: v7x
topology: tpu7x:2x2x1
jax: 0.10.0
libtpu: 0.0.40
codegen_flags: <defaults>
</compile_context>

<pallas_src>
import functools

import jax
import jax.numpy as jnp
from jax.experimental import pallas as pl
from jax.experimental.pallas import tpu as pltpu


def _round_up(x, m):
    return (x + m - 1) // m * m


def gin_fused_kernel(x_ref, adj_ref, w1_ref, b1_ref, w2_ref, b2_ref,
                     scale_ref, shift_ref, out_ref, *, num_layers, eps):
    # adj stored bf16 in HBM (exact small integers); upcast once for f32 matmuls.
    adj = adj_ref[...].astype(jnp.float32)
    h = x_ref[...]

    # Layers are unrolled statically (num_layers is a Python constant); h is a
    # carried value, no persistent scratch needed.
    for l in range(num_layers):
        # GINConv aggregation: z_i = (1+eps)*h_i + sum_{j in N(i)} h_j  (adj @ h on MXU)
        agg = jnp.dot(adj, h, preferred_element_type=jnp.float32)
        z = (1.0 + eps[l]) * h + agg

        # MLP: Linear(F, 2H) -> ReLU -> Linear(2H, H)
        h1 = jnp.dot(z, w1_ref[l], preferred_element_type=jnp.float32) + b1_ref[l]
        h1 = jnp.maximum(h1, 0.0)
        h2 = jnp.dot(h1, w2_ref[l], preferred_element_type=jnp.float32) + b2_ref[l]

        # Eval-mode BatchNorm1d folded to an affine transform.
        h = h2 * scale_ref[l] + shift_ref[l]

        # ReLU on all layers except the last; dropout is identity in eval mode.
        if l != num_layers - 1:
            h = jnp.maximum(h, 0.0)

    out_ref[...] = h


def gin_forward(x, edge_index, params):
    """x: [N, F] float32, edge_index: [2, E] int32 (row 0 = src, row 1 = dst)."""
    num_layers = len(params)
    N, F = x.shape
    H2 = params[0]["w1"].shape[1]       # 2 * hidden_dim
    H = params[0]["w2"].shape[1]        # hidden_dim

    LANE = 128
    D = max(_round_up(F, LANE), _round_up(H, LANE))   # common padded feature width
    H2p = _round_up(H2, LANE)
    Np = _round_up(N, LANE)             # lane-align adj contraction dim / fill MXU rows

    # Dense adjacency: adj[dst, src] = multiplicity of edge src -> dst (GIN sum-agg).
    # Stored bf16 (small integers are exact) to halve HBM DMA + VMEM footprint.
    src, dst = edge_index[0], edge_index[1]
    adj = jnp.zeros((Np, Np), jnp.float32).at[dst, src].add(1.0).astype(jnp.bfloat16)

    # Zero-pad node features into the common padded width.
    x_p = jnp.zeros((Np, D), jnp.float32).at[:N, :F].set(x)

    def pad2(a, rows, cols):
        return jnp.pad(a, ((0, rows - a.shape[0]), (0, cols - a.shape[1])))

    # Stack per-layer parameters along a leading layer axis (zero-padded lanes).
    w1_s = jnp.stack([pad2(p["w1"], D, H2p) for p in params])      # [L, D, H2p]
    b1_s = jnp.stack([pad2(p["b1"], 1, H2p) for p in params])      # [L, 1, H2p]
    w2_s = jnp.stack([pad2(p["w2"], H2p, D) for p in params])      # [L, H2p, D]
    b2_s = jnp.stack([pad2(p["b2"], 1, D) for p in params])        # [L, 1, D]
    scale_s = jnp.stack([pad2(p["scale"], 1, D) for p in params])  # [L, 1, D] (pad=0)
    shift_s = jnp.stack([pad2(p["shift"], 1, D) for p in params])  # [L, 1, D] (pad=0)
    eps = tuple(float(p.get("eps", 0.0)) for p in params)          # static GIN eps

    # VMEM budget derived from actual buffer sizes, capped below v7x's 64 MiB.
    vmem_bytes = (adj.size * 2 + x_p.size * 4 + Np * D * 4
                  + 4 * (w1_s.size + b1_s.size + w2_s.size + b2_s.size
                         + scale_s.size + shift_s.size))
    vmem_limit = int(min(max(2 * vmem_bytes, 16 * 1024 * 1024), 48 * 1024 * 1024))

    flops = num_layers * (2 * Np * Np * D + 2 * Np * D * H2p + 2 * Np * H2p * D)
    bytes_accessed = (2 * Np * Np + 4 * Np * D * 2
                      + 4 * num_layers * (D * H2p + H2p * D + H2p + 3 * D))

    vspec = pl.BlockSpec(memory_space=pltpu.MemorySpace.VMEM)
    out = pl.pallas_call(
        functools.partial(gin_fused_kernel, num_layers=num_layers, eps=eps),
        out_shape=jax.ShapeDtypeStruct((Np, D), jnp.float32),
        in_specs=[vspec] * 8,
        out_specs=vspec,
        compiler_params=pltpu.CompilerParams(vmem_limit_bytes=vmem_limit),
        cost_estimate=pl.CostEstimate(flops=flops, transcendentals=0,
                                      bytes_accessed=bytes_accessed),
    )(x_p, adj, w1_s, b1_s, w2_s, b2_s, scale_s, shift_s)

    # Strip padding: pred=False -> return node_representation [N, hidden_dim].
    return out[:N, :H]


def init_params(key, num_features, hidden_dim, num_layers):
    """Deterministic synthetic parameters for the GIN module (eval mode)."""
    params = []
    bn_eps = 1e-5
    for layer in range(num_layers):
        in_dim = num_features if layer == 0 else hidden_dim
        key, k1, k2, k3, k4, k5, k6, k7, k8 = jax.random.split(key, 9)
        # Linear weights stored as [in, out] (transposed vs. PyTorch's [out, in]).
        w1 = jax.random.normal(k1, (in_dim, 2 * hidden_dim), jnp.float32) * 0.1
        b1 = jax.random.normal(k2, (1, 2 * hidden_dim), jnp.float32) * 0.05
        w2 = jax.random.normal(k3, (2 * hidden_dim, hidden_dim), jnp.float32) * 0.1
        b2 = jax.random.normal(k4, (1, hidden_dim), jnp.float32) * 0.05
        # BatchNorm1d parameters / running statistics (eval mode), folded to affine.
        gamma = 1.0 + 0.1 * jax.random.normal(k5, (1, hidden_dim), jnp.float32)
        beta = 0.1 * jax.random.normal(k6, (1, hidden_dim), jnp.float32)
        running_mean = 0.1 * jax.random.normal(k7, (1, hidden_dim), jnp.float32)
        running_var = jnp.abs(1.0 + 0.1 * jax.random.normal(k8, (1, hidden_dim),
                                                            jnp.float32))
        scale = gamma / jnp.sqrt(running_var + bn_eps)
        shift = beta - running_mean * scale
        params.append(dict(w1=w1, b1=b1, w2=w2, b2=b2,
                           scale=scale, shift=shift, eps=0.0))
    return params


def gin_reference(x, edge_index, params):
    """Pure-JAX reference (same folded eval-mode semantics) for validation."""
    N = x.shape[0]
    src, dst = edge_index[0], edge_index[1]
    adj = jnp.zeros((N, N), jnp.float32).at[dst, src].add(1.0)
    h = x
    hi = jax.lax.Precision.HIGHEST
    for i, p in enumerate(params):
        z = (1.0 + p.get("eps", 0.0)) * h + jnp.dot(adj, h, precision=hi)
        h1 = jnp.maximum(jnp.dot(z, p["w1"], precision=hi) + p["b1"], 0.0)
        h2 = jnp.dot(h1, p["w2"], precision=hi) + p["b2"]
        h = h2 * p["scale"] + p["shift"]
        if i != len(params) - 1:
            h = jnp.maximum(h, 0.0)
    return h


if __name__ == "__main__":
    N = 16            # number of graph nodes
    num_features = 8
    hidden_dim = 32
    num_layers = 3

    key = jax.random.PRNGKey(0)
    kx, kp = jax.random.split(key)
    x = jax.random.normal(kx, (N, num_features), jnp.float32)

    # Deterministic ring graph, both directions: edge_index shape [2, 2N].
    idx = jnp.arange(N, dtype=jnp.int32)
    src = jnp.concatenate([idx, (idx + 1) % N])
    dst = jnp.concatenate([(idx + 1) % N, idx])
    edge_index = jnp.stack([src, dst], axis=0)

    params = init_params(kp, num_features, hidden_dim, num_layers)

    out = gin_forward(x, edge_index, params)
    out = jax.block_until_ready(out)
    assert out.shape == (N, hidden_dim)

    ref = jax.block_until_ready(gin_reference(x, edge_index, params))
    assert jnp.allclose(out, ref, atol=1e-3, rtol=1e-3), "mismatch vs reference"

    print("KERNEL_OK")
</pallas_src>

<mosaic_0001>
module attributes {stable_mosaic.version = 11 : i64} {
  func.func @gin_fused_kernel(%arg0: memref<128x128xf32, #tpu.memory_space<vmem>>, %arg1: memref<128x128xbf16, #tpu.memory_space<vmem>>, %arg2: memref<3x128x128xf32, #tpu.memory_space<vmem>>, %arg3: memref<3x1x128xf32, #tpu.memory_space<vmem>>, %arg4: memref<3x128x128xf32, #tpu.memory_space<vmem>>, %arg5: memref<3x1x128xf32, #tpu.memory_space<vmem>>, %arg6: memref<3x1x128xf32, #tpu.memory_space<vmem>>, %arg7: memref<3x1x128xf32, #tpu.memory_space<vmem>>, %arg8: memref<128x128xf32, #tpu.memory_space<vmem>>) attributes {dimension_semantics = [], scalar_prefetch = 0 : i64, scratch_operands = 0 : i64, tpu.core_type = #tpu.core_type<tc>} {
    %c0 = arith.constant 0 : index
    %c0_0 = arith.constant 0 : index
    %0 = vector.load %arg1[%c0, %c0_0] : memref<128x128xbf16, #tpu.memory_space<vmem>>, vector<128x128xbf16>
    %1 = arith.extf %0 : vector<128x128xbf16> to vector<128x128xf32>
    %c0_1 = arith.constant 0 : index
    %c0_2 = arith.constant 0 : index
    %2 = vector.load %arg0[%c0_1, %c0_2] : memref<128x128xf32, #tpu.memory_space<vmem>>, vector<128x128xf32>
    %cst = arith.constant dense<0.000000e+00> : vector<128x128xf32>
    %3 = tpu.matmul %1, %2, %cst {dimension_numbers = #tpu.dot_dimension_numbers<[1], [0], [0], [1], [0, 0, 1, 1], [], []>} : vector<128x128xf32>, vector<128x128xf32>, vector<128x128xf32> -> vector<128x128xf32>
    %cst_3 = arith.constant 1.000000e+00 : f32
    %4 = vector.broadcast %cst_3 : f32 to vector<128x128xf32>
    %5 = arith.mulf %4, %2 : vector<128x128xf32>
    %6 = arith.addf %5, %3 : vector<128x128xf32>
    %c0_4 = arith.constant 0 : index
    %c0_5 = arith.constant 0 : index
    %c0_6 = arith.constant 0 : index
    %7 = vector.load %arg2[%c0_4, %c0_5, %c0_6] : memref<3x128x128xf32, #tpu.memory_space<vmem>>, vector<1x128x128xf32>
    %8 = vector.shape_cast %7 : vector<1x128x128xf32> to vector<128x128xf32>
    %cst_7 = arith.constant dense<0.000000e+00> : vector<128x128xf32>
    %9 = tpu.matmul %6, %8, %cst_7 {dimension_numbers = #tpu.dot_dimension_numbers<[1], [0], [0], [1], [0, 0, 1, 1], [], []>} : vector<128x128xf32>, vector<128x128xf32>, vector<128x128xf32> -> vector<128x128xf32>
    %c0_8 = arith.constant 0 : index
    %c0_9 = arith.constant 0 : index
    %c0_10 = arith.constant 0 : index
    %10 = vector.load %arg3[%c0_8, %c0_9, %c0_10] : memref<3x1x128xf32, #tpu.memory_space<vmem>>, vector<1x1x128xf32>
    %11 = vector.shape_cast %10 : vector<1x1x128xf32> to vector<1x128xf32>
    %12 = vector.broadcast %11 : vector<1x128xf32> to vector<128x128xf32>
    %13 = arith.addf %9, %12 : vector<128x128xf32>
    %cst_11 = arith.constant 0.000000e+00 : f32
    %14 = vector.broadcast %cst_11 : f32 to vector<128x128xf32>
    %15 = arith.maximumf %13, %14 : vector<128x128xf32>
    %c0_12 = arith.constant 0 : index
    %c0_13 = arith.constant 0 : index
    %c0_14 = arith.constant 0 : index
    %16 = vector.load %arg4[%c0_12, %c0_13, %c0_14] : memref<3x128x128xf32, #tpu.memory_space<vmem>>, vector<1x128x128xf32>
    %17 = vector.shape_cast %16 : vector<1x128x128xf32> to vector<128x128xf32>
    %cst_15 = arith.constant dense<0.000000e+00> : vector<128x128xf32>
    %18 = tpu.matmul %15, %17, %cst_15 {dimension_numbers = #tpu.dot_dimension_numbers<[1], [0], [0], [1], [0, 0, 1, 1], [], []>} : vector<128x128xf32>, vector<128x128xf32>, vector<128x128xf32> -> vector<128x128xf32>
    %c0_16 = arith.constant 0 : index
    %c0_17 = arith.constant 0 : index
    %c0_18 = arith.constant 0 : index
    %19 = vector.load %arg5[%c0_16, %c0_17, %c0_18] : memref<3x1x128xf32, #tpu.memory_space<vmem>>, vector<1x1x128xf32>
    %20 = vector.shape_cast %19 : vector<1x1x128xf32> to vector<1x128xf32>
    %21 = vector.broadcast %20 : vector<1x128xf32> to vector<128x128xf32>
    %22 = arith.addf %18, %21 : vector<128x128xf32>
    %c0_19 = arith.constant 0 : index
    %c0_20 = arith.constant 0 : index
    %c0_21 = arith.constant 0 : index
    %23 = vector.load %arg6[%c0_19, %c0_20, %c0_21] : memref<3x1x128xf32, #tpu.memory_space<vmem>>, vector<1x1x128xf32>
    %24 = vector.shape_cast %23 : vector<1x1x128xf32> to vector<1x128xf32>
    %25 = vector.broadcast %24 : vector<1x128xf32> to vector<128x128xf32>
    %26 = arith.mulf %22, %25 : vector<128x128xf32>
    %c0_22 = arith.constant 0 : index
    %c0_23 = arith.constant 0 : index
    %c0_24 = arith.constant 0 : index
    %27 = vector.load %arg7[%c0_22, %c0_23, %c0_24] : memref<3x1x128xf32, #tpu.memory_space<vmem>>, vector<1x1x128xf32>
    %28 = vector.shape_cast %27 : vector<1x1x128xf32> to vector<1x128xf32>
    %29 = vector.broadcast %28 : vector<1x128xf32> to vector<128x128xf32>
    %30 = arith.addf %26, %29 : vector<128x128xf32>
    %cst_25 = arith.constant 0.000000e+00 : f32
    %31 = vector.broadcast %cst_25 : f32 to vector<128x128xf32>
    %32 = arith.maximumf %30, %31 : vector<128x128xf32>
    %cst_26 = arith.constant dense<0.000000e+00> : vector<128x128xf32>
    %33 = tpu.matmul %1, %32, %cst_26 {dimension_numbers = #tpu.dot_dimension_numbers<[1], [0], [0], [1], [0, 0, 1, 1], [], []>} : vector<128x128xf32>, vector<128x128xf32>, vector<128x128xf32> -> vector<128x128xf32>
    %cst_27 = arith.constant 1.000000e+00 : f32
    %34 = vector.broadcast %cst_27 : f32 to vector<128x128xf32>
    %35 = arith.mulf %34, %32 : vector<128x128xf32>
    %36 = arith.addf %35, %33 : vector<128x128xf32>
    %c1 = arith.constant 1 : index
    %c0_28 = arith.constant 0 : index
    %c0_29 = arith.constant 0 : index
    %37 = vector.load %arg2[%c1, %c0_28, %c0_29] : memref<3x128x128xf32, #tpu.memory_space<vmem>>, vector<1x128x128xf32>
    %38 = vector.shape_cast %37 : vector<1x128x128xf32> to vector<128x128xf32>
    %cst_30 = arith.constant dense<0.000000e+00> : vector<128x128xf32>
    %39 = tpu.matmul %36, %38, %cst_30 {dimension_numbers = #tpu.dot_dimension_numbers<[1], [0], [0], [1], [0, 0, 1, 1], [], []>} : vector<128x128xf32>, vector<128x128xf32>, vector<128x128xf32> -> vector<128x128xf32>
    %c1_31 = arith.constant 1 : index
    %c0_32 = arith.constant 0 : index
    %c0_33 = arith.constant 0 : index
    %40 = vector.load %arg3[%c1_31, %c0_32, %c0_33] : memref<3x1x128xf32, #tpu.memory_space<vmem>>, vector<1x1x128xf32>
    %41 = vector.shape_cast %40 : vector<1x1x128xf32> to vector<1x128xf32>
    %42 = vector.broadcast %41 : vector<1x128xf32> to vector<128x128xf32>
    %43 = arith.addf %39, %42 : vector<128x128xf32>
    %cst_34 = arith.constant 0.000000e+00 : f32
    %44 = vector.broadcast %cst_34 : f32 to vector<128x128xf32>
    %45 = arith.maximumf %43, %44 : vector<128x128xf32>
    %c1_35 = arith.constant 1 : index
    %c0_36 = arith.constant 0 : index
    %c0_37 = arith.constant 0 : index
    %46 = vector.load %arg4[%c1_35, %c0_36, %c0_37] : memref<3x128x128xf32, #tpu.memory_space<vmem>>, vector<1x128x128xf32>
    %47 = vector.shape_cast %46 : vector<1x128x128xf32> to vector<128x128xf32>
    %cst_38 = arith.constant dense<0.000000e+00> : vector<128x128xf32>
    %48 = tpu.matmul %45, %47, %cst_38 {dimension_numbers = #tpu.dot_dimension_numbers<[1], [0], [0], [1], [0, 0, 1, 1], [], []>} : vector<128x128xf32>, vector<128x128xf32>, vector<128x128xf32> -> vector<128x128xf32>
    %c1_39 = arith.constant 1 : index
    %c0_40 = arith.constant 0 : index
    %c0_41 = arith.constant 0 : index
    %49 = vector.load %arg5[%c1_39, %c0_40, %c0_41] : memref<3x1x128xf32, #tpu.memory_space<vmem>>, vector<1x1x128xf32>
    %50 = vector.shape_cast %49 : vector<1x1x128xf32> to vector<1x128xf32>
    %51 = vector.broadcast %50 : vector<1x128xf32> to vector<128x128xf32>
    %52 = arith.addf %48, %51 : vector<128x128xf32>
    %c1_42 = arith.constant 1 : index
    %c0_43 = arith.constant 0 : index
    %c0_44 = arith.constant 0 : index
    %53 = vector.load %arg6[%c1_42, %c0_43, %c0_44] : memref<3x1x128xf32, #tpu.memory_space<vmem>>, vector<1x1x128xf32>
    %54 = vector.shape_cast %53 : vector<1x1x128xf32> to vector<1x128xf32>
    %55 = vector.broadcast %54 : vector<1x128xf32> to vector<128x128xf32>
    %56 = arith.mulf %52, %55 : vector<128x128xf32>
    %c1_45 = arith.constant 1 : index
    %c0_46 = arith.constant 0 : index
    %c0_47 = arith.constant 0 : index
    %57 = vector.load %arg7[%c1_45, %c0_46, %c0_47] : memref<3x1x128xf32, #tpu.memory_space<vmem>>, vector<1x1x128xf32>
    %58 = vector.shape_cast %57 : vector<1x1x128xf32> to vector<1x128xf32>
    %59 = vector.broadcast %58 : vector<1x128xf32> to vector<128x128xf32>
    %60 = arith.addf %56, %59 : vector<128x128xf32>
    %cst_48 = arith.constant 0.000000e+00 : f32
    %61 = vector.broadcast %cst_48 : f32 to vector<128x128xf32>
    %62 = arith.maximumf %60, %61 : vector<128x128xf32>
    %cst_49 = arith.constant dense<0.000000e+00> : vector<128x128xf32>
    %63 = tpu.matmul %1, %62, %cst_49 {dimension_numbers = #tpu.dot_dimension_numbers<[1], [0], [0], [1], [0, 0, 1, 1], [], []>} : vector<128x128xf32>, vector<128x128xf32>, vector<128x128xf32> -> vector<128x128xf32>
    %cst_50 = arith.constant 1.000000e+00 : f32
    %64 = vector.broadcast %cst_50 : f32 to vector<128x128xf32>
    %65 = arith.mulf %64, %62 : vector<128x128xf32>
    %66 = arith.addf %65, %63 : vector<128x128xf32>
    %c2 = arith.constant 2 : index
    %c0_51 = arith.constant 0 : index
    %c0_52 = arith.constant 0 : index
    %67 = vector.load %arg2[%c2, %c0_51, %c0_52] : memref<3x128x128xf32, #tpu.memory_space<vmem>>, vector<1x128x128xf32>
    %68 = vector.shape_cast %67 : vector<1x128x128xf32> to vector<128x128xf32>
    %cst_53 = arith.constant dense<0.000000e+00> : vector<128x128xf32>
    %69 = tpu.matmul %66, %68, %cst_53 {dimension_numbers = #tpu.dot_dimension_numbers<[1], [0], [0], [1], [0, 0, 1, 1], [], []>} : vector<128x128xf32>, vector<128x128xf32>, vector<128x128xf32> -> vector<128x128xf32>
    %c2_54 = arith.constant 2 : index
    %c0_55 = arith.constant 0 : index
    %c0_56 = arith.constant 0 : index
    %70 = vector.load %arg3[%c2_54, %c0_55, %c0_56] : memref<3x1x128xf32, #tpu.memory_space<vmem>>, vector<1x1x128xf32>
    %71 = vector.shape_cast %70 : vector<1x1x128xf32> to vector<1x128xf32>
    %72 = vector.broadcast %71 : vector<1x128xf32> to vector<128x128xf32>
    %73 = arith.addf %69, %72 : vector<128x128xf32>
    %cst_57 = arith.constant 0.000000e+00 : f32
    %74 = vector.broadcast %cst_57 : f32 to vector<128x128xf32>
    %75 = arith.maximumf %73, %74 : vector<128x128xf32>
    %c2_58 = arith.constant 2 : index
    %c0_59 = arith.constant 0 : index
    %c0_60 = arith.constant 0 : index
    %76 = vector.load %arg4[%c2_58, %c0_59, %c0_60] : memref<3x128x128xf32, #tpu.memory_space<vmem>>, vector<1x128x128xf32>
    %77 = vector.shape_cast %76 : vector<1x128x128xf32> to vector<128x128xf32>
    %cst_61 = arith.constant dense<0.000000e+00> : vector<128x128xf32>
    %78 = tpu.matmul %75, %77, %cst_61 {dimension_numbers = #tpu.dot_dimension_numbers<[1], [0], [0], [1], [0, 0, 1, 1], [], []>} : vector<128x128xf32>, vector<128x128xf32>, vector<128x128xf32> -> vector<128x128xf32>
    %c2_62 = arith.constant 2 : index
    %c0_63 = arith.constant 0 : index
    %c0_64 = arith.constant 0 : index
    %79 = vector.load %arg5[%c2_62, %c0_63, %c0_64] : memref<3x1x128xf32, #tpu.memory_space<vmem>>, vector<1x1x128xf32>
    %80 = vector.shape_cast %79 : vector<1x1x128xf32> to vector<1x128xf32>
    %81 = vector.broadcast %80 : vector<1x128xf32> to vector<128x128xf32>
    %82 = arith.addf %78, %81 : vector<128x128xf32>
    %c2_65 = arith.constant 2 : index
    %c0_66 = arith.constant 0 : index
    %c0_67 = arith.constant 0 : index
    %83 = vector.load %arg6[%c2_65, %c0_66, %c0_67] : memref<3x1x128xf32, #tpu.memory_space<vmem>>, vector<1x1x128xf32>
    %84 = vector.shape_cast %83 : vector<1x1x128xf32> to vector<1x128xf32>
    %85 = vector.broadcast %84 : vector<1x128xf32> to vector<128x128xf32>
    %86 = arith.mulf %82, %85 : vector<128x128xf32>
    %c2_68 = arith.constant 2 : index
    %c0_69 = arith.constant 0 : index
    %c0_70 = arith.constant 0 : index
    %87 = vector.load %arg7[%c2_68, %c0_69, %c0_70] : memref<3x1x128xf32, #tpu.memory_space<vmem>>, vector<1x1x128xf32>
    %88 = vector.shape_cast %87 : vector<1x1x128xf32> to vector<1x128xf32>
    %89 = vector.broadcast %88 : vector<1x128xf32> to vector<128x128xf32>
    %90 = arith.addf %86, %89 : vector<128x128xf32>
    %c0_71 = arith.constant 0 : index
    %c0_72 = arith.constant 0 : index
    %91 = vector.load %arg8[%c0_71, %c0_72] : memref<128x128xf32, #tpu.memory_space<vmem>>, vector<128x128xf32>
    tpu.vector_store %arg8[%c0_71, %c0_72], %90 {strides = array<i32>} : memref<128x128xf32, #tpu.memory_space<vmem>>, vector<128x128xf32>,
    return
  }
}

</mosaic_0001>

<llo_original>
// kernel: tpu_custom_call.1
$region0: #{tpu_custom_call.1}
  #allocation0 [shape = 'u32[]', space=smem, size = 0x4, offset = 0x4, fixed_abs, tag = 'smem constant byte address 0x4 - core index']
  #allocation1 [shape = 'u32[144,128]{1,0:T(1,128)}', space=vmem, size = 0x12000, scoped, tag = 'internal scratch']
  %s0 = inlined_call_operand.hbm [shape: f32[128,128], index: 0, kind: input, shape index: {}]
  %s1 = inlined_call_operand.hbm [shape: bf16[128,128], index: 1, kind: input, shape index: {}]
  %s2 = inlined_call_operand.hbm [shape: f32[3,128,128], index: 2, kind: input, shape index: {}]
  %s3 = inlined_call_operand.vmem [shape: f32[3,1,128], index: 3, kind: input, shape index: {}]
  %s4 = inlined_call_operand.hbm [shape: f32[3,128,128], index: 4, kind: input, shape index: {}]
  %s5 = inlined_call_operand.vmem [shape: f32[3,1,128], index: 5, kind: input, shape index: {}]
  %s6 = inlined_call_operand.vmem [shape: f32[3,1,128], index: 6, kind: input, shape index: {}]
  %s7 = inlined_call_operand.vmem [shape: f32[3,1,128], index: 7, kind: input, shape index: {}]
  %s8 = inlined_call_operand.hbm [shape: f32[128,128], index: 8, kind: output, shape index: {}]
  %s9 = sld [smem:[#allocation0]]
  $region58: #{tpu_custom_call.1} parent=0
    _
  %s11 = ssub.s32 1, %s9
  %s12 = scalar_select 0, %s11, %s9
  $region1: #{tpu_custom_call.1} parent=0
    #allocation2 [shape = 'u8[65536]{0}', space=vmem, size = 0x10000, scoped, tag = 'input window, operand 0, single buffered']
    #allocation3 [shape = 's32[1]{0}', space=sflag, size = 0x4, scoped, tag = 'scoped memory for tpu_custom_call.1']
    #allocation4 [shape = 's32[1]{0}', space=sflag, size = 0x4, scoped, tag = 'scoped memory for tpu_custom_call.1']
    #allocation5 [shape = 'u8[32768]{0}', space=vmem, size = 0x8000, scoped, tag = 'input window, operand 1, single buffered']
    #allocation6 [shape = 's32[1]{0}', space=sflag, size = 0x4, scoped, tag = 'scoped memory for tpu_custom_call.1']
    #allocation7 [shape = 'u8[196608]{0}', space=vmem, size = 0x30000, scoped, tag = 'input window, operand 2, single buffered']
    #allocation8 [shape = 'u8[196608]{0}', space=vmem, size = 0x30000, scoped, tag = 'input window, operand 4, single buffered']
    #allocation9 [shape = 's32[1]{0}', space=sflag, size = 0x4, scoped, tag = 'scoped memory for tpu_custom_call.1']
    #allocation10 [shape = 'u8[65536]{0}', space=vmem, size = 0x10000, scoped, tag = 'output window, operand 0, single buffered']
    %13 = vsyncpa [#allocation3], 0
    %14 = vsyncpa [#allocation6], 0
    %15 = vsyncpa [#allocation9], 0
    %16 = vsyncpa [#allocation4], 0
    // Predicated region
    $region2: #{tpu_custom_call.1} parent=1 // pred_check
      _
    $region3: #{tpu_custom_call.1} parent=1 // pred_check_branch
      %18 = sbr.rel (0) target = $region5
    $region4: #{tpu_custom_call.1} parent=1 // pred_region
      %s20 = ssub.s32 2048, 2048
      %21 = vsyncadd [#allocation3], %s20
      %s22 = sshll.u32 [#allocation2], 4
      %s23 = int_to_ptr.vmem [resolvable:$true] %s22
      %28 = dma.hbm_to_vmem [thread:$0]  %s0, 2048, %s23, [#allocation3], 128, 128, 8
    $region5: #{tpu_custom_call.1} parent=1 // pred_fallthru
      _
    // Predicated region
    $region6: #{tpu_custom_call.1} parent=1 // pred_check
      _
    $region7: #{tpu_custom_call.1} parent=1 // pred_check_branch
      %30 = sbr.rel (0) target = $region9
    $region8: #{tpu_custom_call.1} parent=1 // pred_region
      %s32 = ssub.s32 1024, 1024
      %33 = vsyncadd [#allocation6], %s32
      %s34 = sshll.u32 [#allocation5], 4
      %s35 = int_to_ptr.vmem [resolvable:$true] %s34
      %40 = dma.hbm_to_vmem [thread:$0]  %s1, 1024, %s35, [#allocation6], 64, 64, 4
    $region9: #{tpu_custom_call.1} parent=1 // pred_fallthru
      _
    // Predicated region
    $region10: #{tpu_custom_call.1} parent=1 // pred_check
      _
    $region11: #{tpu_custom_call.1} parent=1 // pred_check_branch
      %42 = sbr.rel (0) target = $region13
    $region12: #{tpu_custom_call.1} parent=1 // pred_region
      %s44 = ssub.s32 6144, 6144
      %45 = vsyncadd [#allocation6], %s44
      %s46 = sshll.u32 [#allocation7], 4
      %s47 = int_to_ptr.vmem [resolvable:$true] %s46
      %52 = dma.hbm_to_vmem [thread:$0]  %s2, 6144, %s47, [#allocation6], 128, 128, 8
    $region13: #{tpu_custom_call.1} parent=1 // pred_fallthru
      _
    // Predicated region
    $region14: #{tpu_custom_call.1} parent=1 // pred_check
      _
    $region15: #{tpu_custom_call.1} parent=1 // pred_check_branch
      %54 = sbr.rel (0) target = $region17
    $region16: #{tpu_custom_call.1} parent=1 // pred_region
      _
    $region17: #{tpu_custom_call.1} parent=1 // pred_fallthru
      _
    // Predicated region
    $region18: #{tpu_custom_call.1} parent=1 // pred_check
      _
    $region19: #{tpu_custom_call.1} parent=1 // pred_check_branch
      %56 = sbr.rel (0) target = $region21
    $region20: #{tpu_custom_call.1} parent=1 // pred_region
      %s58 = ssub.s32 6144, 6144
      %59 = vsyncadd [#allocation9], %s58
      %s60 = sshll.u32 [#allocation8], 4
      %s61 = int_to_ptr.vmem [resolvable:$true] %s60
      %66 = dma.hbm_to_vmem [thread:$0]  %s4, 6144, %s61, [#allocation9], 128, 128, 8
    $region21: #{tpu_custom_call.1} parent=1 // pred_fallthru
      _
    // Predicated region
    $region22: #{tpu_custom_call.1} parent=1 // pred_check
      _
    $region23: #{tpu_custom_call.1} parent=1 // pred_check_branch
      %68 = sbr.rel (0) target = $region25
    $region24: #{tpu_custom_call.1} parent=1 // pred_region
      _
    $region25: #{tpu_custom_call.1} parent=1 // pred_fallthru
      _
    // Predicated region
    $region26: #{tpu_custom_call.1} parent=1 // pred_check
      _
    $region27: #{tpu_custom_call.1} parent=1 // pred_check_branch
      %70 = sbr.rel (0) target = $region29
    $region28: #{tpu_custom_call.1} parent=1 // pred_region
      _
    $region29: #{tpu_custom_call.1} parent=1 // pred_fallthru
      _
    // Predicated region
    $region30: #{tpu_custom_call.1} parent=1 // pred_check
      _
    $region31: #{tpu_custom_call.1} parent=1 // pred_check_branch
      %72 = sbr.rel (0) target = $region33
    $region32: #{tpu_custom_call.1} parent=1 // pred_region
      _
    $region33: #{tpu_custom_call.1} parent=1 // pred_fallthru
      _
    // Predicated region
    $region34: #{tpu_custom_call.1} parent=1 // pred_check
      _
    $region35: #{tpu_custom_call.1} parent=1 // pred_check_branch
      %74 = sbr.rel (0) target = $region37
    $region36: #{tpu_custom_call.1} parent=1 // pred_region
      %75 = dma.done [#allocation3], 2048
    $region37: #{tpu_custom_call.1} parent=1 // pred_fallthru
      _
    // Predicated region
    $region38: #{tpu_custom_call.1} parent=1 // pred_check
      _
    $region39: #{tpu_custom_call.1} parent=1 // pred_check_branch
      %77 = sbr.rel (0) target = $region41
    $region40: #{tpu_custom_call.1} parent=1 // pred_region
      %78 = dma.done [#allocation6], 1024
    $region41: #{tpu_custom_call.1} parent=1 // pred_fallthru
      _
    // Predicated region
    $region42: #{tpu_custom_call.1} parent=1 // pred_check
      _
    $region43: #{tpu_custom_call.1} parent=1 // pred_check_branch
      %80 = sbr.rel (0) target = $region45
    $region44: #{tpu_custom_call.1} parent=1 // pred_region
      %81 = dma.done [#allocation6], 6144
    $region45: #{tpu_custom_call.1} parent=1 // pred_fallthru
      _
    // Predicated region
    $region46: #{tpu_custom_call.1} parent=1 // pred_check
      _
    $region47: #{tpu_custom_call.1} parent=1 // pred_check_branch
      %83 = sbr.rel (0) target = $region49
    $region48: #{tpu_custom_call.1} parent=1 // pred_region
      %84 = dma.done [#allocation9], 6144
    $region49: #{tpu_custom_call.1} parent=1 // pred_fallthru
      _
    %v85 = vld [vmem:[#allocation5] sm:$0xf]
    %v86 = vld [vmem:[#allocation5 + $0x4] sm:$0xf]
    %v87 = vld [vmem:[#allocation5 + $0x8] sm:$0xf]
    %v88 = vld [vmem:[#allocation5 + $0xc] sm:$0xf]
    %v89 = vld [vmem:[#allocation5 + $0x10] sm:$0xf]
    %v90 = vld [vmem:[#allocation5 + $0x14] sm:$0xf]
    %v91 = vld [vmem:[#allocation5 + $0x18] sm:$0xf]
    %v92 = vld [vmem:[#allocation5 + $0x1c] sm:$0xf]
    %v93 = vld [vmem:[#allocation5 + $0x20] sm:$0xf]
    %v94 = vld [vmem:[#allocation5 + $0x24] sm:$0xf]
    %v95 = vld [vmem:[#allocation5 + $0x28] sm:$0xf]
    %v96 = vld [vmem:[#allocation5 + $0x2c] sm:$0xf]
    %v97 = vld [vmem:[#allocation5 + $0x30] sm:$0xf]
    %v98 = vld [vmem:[#allocation5 + $0x34] sm:$0xf]
    %v99 = vld [vmem:[#allocation5 + $0x38] sm:$0xf]
    %v100 = vld [vmem:[#allocation5 + $0x3c] sm:$0xf]
    %v101 = vunpack.c.l.bf16 %v85
    %v102 = vunpack.c.l.bf16 %v86
    %v103 = vunpack.c.l.bf16 %v87
    %v104 = vunpack.c.l.bf16 %v88
    %v105 = vunpack.c.l.bf16 %v89
    %v106 = vunpack.c.l.bf16 %v90
    %v107 = vunpack.c.l.bf16 %v91
    %v108 = vunpack.c.l.bf16 %v92
    %v109 = vunpack.c.l.bf16 %v93
    %v110 = vunpack.c.l.bf16 %v94
    %v111 = vunpack.c.l.bf16 %v95
    %v112 = vunpack.c.l.bf16 %v96
    %v113 = vunpack.c.l.bf16 %v97
    %v114 = vunpack.c.l.bf16 %v98
    %v115 = vunpack.c.l.bf16 %v99
    %v116 = vunpack.c.l.bf16 %v100
    %v117 = vld [vmem:[#allocation2] sm:$0xff]
    %v118 = vld [vmem:[#allocation2 + $0x8] sm:$0xff]
    %v119 = vld [vmem:[#allocation2 + $0x10] sm:$0xff]
    %v120 = vld [vmem:[#allocation2 + $0x18] sm:$0xff]
    %v121 = vld [vmem:[#allocation2 + $0x20] sm:$0xff]
    %v122 = vld [vmem:[#allocation2 + $0x28] sm:$0xff]
    %v123 = vld [vmem:[#allocation2 + $0x30] sm:$0xff]
    %v124 = vld [vmem:[#allocation2 + $0x38] sm:$0xff]
    %v125 = vld [vmem:[#allocation2 + $0x40] sm:$0xff]
    %v126 = vld [vmem:[#allocation2 + $0x48] sm:$0xff]
    %v127 = vld [vmem:[#allocation2 + $0x50] sm:$0xff]
    %v128 = vld [vmem:[#allocation2 + $0x58] sm:$0xff]
    %v129 = vld [vmem:[#allocation2 + $0x60] sm:$0xff]
    %v130 = vld [vmem:[#allocation2 + $0x68] sm:$0xff]
    %v131 = vld [vmem:[#allocation2 + $0x70] sm:$0xff]
    %v132 = vld [vmem:[#allocation2 + $0x78] sm:$0xff]
    %133 = vmatprep.subr.mxu0 0.0
    %134 = vmatpush1.msra.mxu0 %v117
    %135 = vmatprep.subr.mxu0 0.0
    %136 = vmatpush1.msra.mxu0 %v118
    %137 = vmatprep.subr.mxu0 0.0
    %138 = vmatpush1.msra.mxu0 %v119
    %139 = vmatprep.subr.mxu0 0.0
    %140 = vmatpush1.msra.mxu0 %v120
    %141 = vmatprep.subr.mxu0 0.0
    %142 = vmatpush1.msra.mxu0 %v121
    %143 = vmatprep.subr.mxu0 0.0
    %144 = vmatpush1.msra.mxu0 %v122
    %145 = vmatprep.subr.mxu0 0.0
    %146 = vmatpush1.msra.mxu0 %v123
    %147 = vmatprep.subr.mxu0 0.0
    %148 = vmatpush1.msra.mxu0 %v124
    %149 = vmatprep.subr.mxu0 0.0
    %150 = vmatpush1.msra.mxu0 %v125
    %151 = vmatprep.subr.mxu0 0.0
    %152 = vmatpush1.msra.mxu0 %v126
    %153 = vmatprep.subr.mxu0 0.0
    %154 = vmatpush1.msra.mxu0 %v127
    %155 = vmatprep.subr.mxu0 0.0
    %156 = vmatpush1.msra.mxu0 %v128
    %157 = vmatprep.subr.mxu0 0.0
    %158 = vmatpush1.msra.mxu0 %v129
    %159 = vmatprep.subr.mxu0 0.0
    %160 = vmatpush1.msra.mxu0 %v130
    %161 = vmatprep.subr.mxu0 0.0
    %162 = vmatpush1.msra.mxu0 %v131
    %163 = vmatprep.subr.mxu0 0.0
    %164 = vmatpush1.msra.mxu0 %v132
    %165 = vmatprep.subr.mxu0 0.0
    %166 = vmatpush1.msra.mxu0 0.0
    %167 = vmatprep.subr.mxu0 0.0
    %168 = vmatpush1.msra.mxu0 0.0
    %169 = vmatprep.subr.mxu0 0.0
    %170 = vmatpush1.msra.mxu0 0.0
    %171 = vmatprep.subr.mxu0 0.0
    %172 = vmatpush1.msra.mxu0 0.0
    %173 = vmatprep.subr.mxu0 0.0
    %174 = vmatpush1.msra.mxu0 0.0
    %175 = vmatprep.subr.mxu0 0.0
    %176 = vmatpush1.msra.mxu0 0.0
    %177 = vmatprep.subr.mxu0 0.0
    %178 = vmatpush1.msra.mxu0 0.0
    %179 = vmatprep.subr.mxu0 0.0
    %180 = vmatpush1.msra.mxu0 0.0
    %181 = vmatprep.subr.mxu0 0.0
    %182 = vmatpush1.msra.mxu0 0.0
    %183 = vmatprep.subr.mxu0 0.0
    %184 = vmatpush1.msra.mxu0 0.0
    %185 = vmatprep.subr.mxu0 0.0
    %186 = vmatpush1.msra.mxu0 0.0
    %187 = vmatprep.subr.mxu0 0.0
    %188 = vmatpush1.msra.mxu0 0.0
    %189 = vmatprep.subr.mxu0 0.0
    %190 = vmatpush1.msra.mxu0 0.0
    %191 = vmatprep.subr.mxu0 0.0
    %192 = vmatpush1.msra.mxu0 0.0
    %193 = vmatprep.subr.mxu0 0.0
    %194 = vmatpush1.msra.mxu0 0.0
    %195 = vmatprep.subr.mxu0 0.0
    %196 = vmatpush1.msra.mxu0 0.0
    %197 = vmatprep.mubr.f32.mxu0 0.0
    %198 = vmatmul.mubr.f32.gmra.mrb[0].mxu0 %v101
    %v199 = vpop.f32.mrb[0].mxu0
    %v200 = vadd.f32 0.0, %v199
    %v201 = vpop.f32.mrb[0].mxu0
    %202 = vmatprep.mubr.f32.mxu0 0.0
    %203 = vmatmul.mubr.f32.gmra.mrb[0].mxu0 %v102
    %v204 = vpop.f32.mrb[0].mxu0
    %v205 = vadd.f32 0.0, %v204
    %v206 = vpop.f32.mrb[0].mxu0
    %207 = vmatprep.mubr.f32.mxu0 0.0
    %208 = vmatmul.mubr.f32.gmra.mrb[0].mxu0 %v103
    %v209 = vpop.f32.mrb[0].mxu0
    %v210 = vadd.f32 0.0, %v209
    %v211 = vpop.f32.mrb[0].mxu0
    %212 = vmatprep.mubr.f32.mxu0 0.0
    %213 = vmatmul.mubr.f32.gmra.mrb[0].mxu0 %v104
    %v214 = vpop.f32.mrb[0].mxu0
    %v215 = vadd.f32 0.0, %v214
    %v216 = vpop.f32.mrb[0].mxu0
    %217 = vmatprep.mubr.f32.mxu0 0.0
    %218 = vmatmul.mubr.f32.gmra.mrb[0].mxu0 %v105
    %v219 = vpop.f32.mrb[0].mxu0
    %v220 = vadd.f32 0.0, %v219
    %v221 = vpop.f32.mrb[0].mxu0
    %222 = vmatprep.mubr.f32.mxu0 0.0
    %223 = vmatmul.mubr.f32.gmra.mrb[0].mxu0 %v106
    %v224 = vpop.f32.mrb[0].mxu0
    %v225 = vadd.f32 0.0, %v224
    %v226 = vpop.f32.mrb[0].mxu0
    %227 = vmatprep.mubr.f32.mxu0 0.0
    %228 = vmatmul.mubr.f32.gmra.mrb[0].mxu0 %v107
    %v229 = vpop.f32.mrb[0].mxu0
    %v230 = vadd.f32 0.0, %v229
    %v231 = vpop.f32.mrb[0].mxu0
    %232 = vmatprep.mubr.f32.mxu0 0.0
    %233 = vmatmul.mubr.f32.gmra.mrb[0].mxu0 %v108
    %v234 = vpop.f32.mrb[0].mxu0
    %v235 = vadd.f32 0.0, %v234
    %v236 = vpop.f32.mrb[0].mxu0
    %237 = vmatprep.mubr.f32.mxu0 0.0
    %238 = vmatmul.mubr.f32.gmra.mrb[0].mxu0 %v109
    %v239 = vpop.f32.mrb[0].mxu0
    %v240 = vadd.f32 0.0, %v239
    %v241 = vpop.f32.mrb[0].mxu0
    %242 = vmatprep.mubr.f32.mxu0 0.0
    %243 = vmatmul.mubr.f32.gmra.mrb[0].mxu0 %v110
    %v244 = vpop.f32.mrb[0].mxu0
    %v245 = vadd.f32 0.0, %v244
    %v246 = vpop.f32.mrb[0].mxu0
    %247 = vmatprep.mubr.f32.mxu0 0.0
    %248 = vmatmul.mubr.f32.gmra.mrb[0].mxu0 %v111
    %v249 = vpop.f32.mrb[0].mxu0
    %v250 = vadd.f32 0.0, %v249
    %v251 = vpop.f32.mrb[0].mxu0
    %252 = vmatprep.mubr.f32.mxu0 0.0
    %253 = vmatmul.mubr.f32.gmra.mrb[0].mxu0 %v112
    %v254 = vpop.f32.mrb[0].mxu0
    %v255 = vadd.f32 0.0, %v254
    %v256 = vpop.f32.mrb[0].mxu0
    %257 = vmatprep.mubr.f32.mxu0 0.0
    %258 = vmatmul.mubr.f32.gmra.mrb[0].mxu0 %v113
    %v259 = vpop.f32.mrb[0].mxu0
    %v260 = vadd.f32 0.0, %v259
    %v261 = vpop.f32.mrb[0].mxu0
    %262 = vmatprep.mubr.f32.mxu0 0.0
    %263 = vmatmul.mubr.f32.gmra.mrb[0].mxu0 %v114
    %v264 = vpop.f32.mrb[0].mxu0
    %v265 = vadd.f32 0.0, %v264
    %v266 = vpop.f32.mrb[0].mxu0
    %267 = vmatprep.mubr.f32.mxu0 0.0
    %268 = vmatmul.mubr.f32.gmra.mrb[0].mxu0 %v115
    %v269 = vpop.f32.mrb[0].mxu0
    %v270 = vadd.f32 0.0, %v269
    %v271 = vpop.f32.mrb[0].mxu0
    %272 = vmatprep.mubr.f32.mxu0 0.0
    %273 = vmatmul.mubr.f32.gmra.mrb[0].mxu0 %v116
    %v274 = vpop.f32.mrb[0].mxu0
    %v275 = vadd.f32 0.0, %v274
    %v276 = vpop.f32.mrb[0].mxu0
    %277 = vdwg.mxu0
    %v278 = vadd.f32 %v117, %v200
    %v279 = vadd.f32 %v118, %v205
    %v280 = vadd.f32 %v119, %v210
    %v281 = vadd.f32 %v120, %v215
    %v282 = vadd.f32 %v121, %v220
    %v283 = vadd.f32 %v122, %v225
    %v284 = vadd.f32 %v123, %v230
    %v285 = vadd.f32 %v124, %v235
    %v286 = vadd.f32 %v125, %v240
    %v287 = vadd.f32 %v126, %v245
    %v288 = vadd.f32 %v127, %v250
    %v289 = vadd.f32 %v128, %v255
    %v290 = vadd.f32 %v129, %v260
    %v291 = vadd.f32 %v130, %v265
    %v292 = vadd.f32 %v131, %v270
    %v293 = vadd.f32 %v132, %v275
    %v294 = vld [vmem:[#allocation7] sm:$0xff]
    %v295 = vld [vmem:[#allocation7 + $0x8] sm:$0xff]
    %v296 = vld [vmem:[#allocation7 + $0x10] sm:$0xff]
    %v297 = vld [vmem:[#allocation7 + $0x18] sm:$0xff]
    %v298 = vld [vmem:[#allocation7 + $0x20] sm:$0xff]
    %v299 = vld [vmem:[#allocation7 + $0x28] sm:$0xff]
    %v300 = vld [vmem:[#allocation7 + $0x30] sm:$0xff]
    %v301 = vld [vmem:[#allocation7 + $0x38] sm:$0xff]
    %v302 = vld [vmem:[#allocation7 + $0x40] sm:$0xff]
    %v303 = vld [vmem:[#allocation7 + $0x48] sm:$0xff]
    %v304 = vld [vmem:[#allocation7 + $0x50] sm:$0xff]
    %v305 = vld [vmem:[#allocation7 + $0x58] sm:$0xff]
    %v306 = vld [vmem:[#allocation7 + $0x60] sm:$0xff]
    %v307 = vld [vmem:[#allocation7 + $0x68] sm:$0xff]
    %v308 = vld [vmem:[#allocation7 + $0x70] sm:$0xff]
    %v309 = vld [vmem:[#allocation7 + $0x78] sm:$0xff]
    %v310 = vld [vmem:[%s3] sm:$0x1]
    %v312 = vlaneseq
    %v313 = vshrl.u32 %v312, 7
    %v314 = vsub.s32 0, %v313
    %v315 = vrot.slane %v310, %v314
    %317 = vmatprep.subr.mxu0 0.0
    %318 = vmatpush1.msra.mxu0 %v294
    %319 = vmatprep.subr.mxu0 0.0
    %320 = vmatpush1.msra.mxu0 %v295
    %321 = vmatprep.subr.mxu0 0.0
    %322 = vmatpush1.msra.mxu0 %v296
    %323 = vmatprep.subr.mxu0 0.0
    %324 = vmatpush1.msra.mxu0 %v297
    %325 = vmatprep.subr.mxu0 0.0
    %326 = vmatpush1.msra.mxu0 %v298
    %327 = vmatprep.subr.mxu0 0.0
    %328 = vmatpush1.msra.mxu0 %v299
    %329 = vmatprep.subr.mxu0 0.0
    %330 = vmatpush1.msra.mxu0 %v300
    %331 = vmatprep.subr.mxu0 0.0
    %332 = vmatpush1.msra.mxu0 %v301
    %333 = vmatprep.subr.mxu0 0.0
    %334 = vmatpush1.msra.mxu0 %v302
    %335 = vmatprep.subr.mxu0 0.0
    %336 = vmatpush1.msra.mxu0 %v303
    %337 = vmatprep.subr.mxu0 0.0
    %338 = vmatpush1.msra.mxu0 %v304
    %339 = vmatprep.subr.mxu0 0.0
    %340 = vmatpush1.msra.mxu0 %v305
    %341 = vmatprep.subr.mxu0 0.0
    %342 = vmatpush1.msra.mxu0 %v306
    %343 = vmatprep.subr.mxu0 0.0
    %344 = vmatpush1.msra.mxu0 %v307
    %345 = vmatprep.subr.mxu0 0.0
    %346 = vmatpush1.msra.mxu0 %v308
    %347 = vmatprep.subr.mxu0 0.0
    %348 = vmatpush1.msra.mxu0 %v309
    %349 = vmatprep.subr.mxu0 0.0
    %350 = vmatpush1.msra.mxu0 0.0
    %351 = vmatprep.subr.mxu0 0.0
    %352 = vmatpush1.msra.mxu0 0.0
    %353 = vmatprep.subr.mxu0 0.0
    %354 = vmatpush1.msra.mxu0 0.0
    %355 = vmatprep.subr.mxu0 0.0
    %356 = vmatpush1.msra.mxu0 0.0
    %357 = vmatprep.subr.mxu0 0.0
    %358 = vmatpush1.msra.mxu0 0.0
    %359 = vmatprep.subr.mxu0 0.0
    %360 = vmatpush1.msra.mxu0 0.0
    %361 = vmatprep.subr.mxu0 0.0
    %362 = vmatpush1.msra.mxu0 0.0
    %363 = vmatprep.subr.mxu0 0.0
    %364 = vmatpush1.msra.mxu0 0.0
    %365 = vmatprep.subr.mxu0 0.0
    %366 = vmatpush1.msra.mxu0 0.0
    %367 = vmatprep.subr.mxu0 0.0
    %368 = vmatpush1.msra.mxu0 0.0
    %369 = vmatprep.subr.mxu0 0.0
    %370 = vmatpush1.msra.mxu0 0.0
    %371 = vmatprep.subr.mxu0 0.0
    %372 = vmatpush1.msra.mxu0 0.0
    %373 = vmatprep.subr.mxu0 0.0
    %374 = vmatpush1.msra.mxu0 0.0
    %375 = vmatprep.subr.mxu0 0.0
    %376 = vmatpush1.msra.mxu0 0.0
    %377 = vmatprep.subr.mxu0 0.0
    %378 = vmatpush1.msra.mxu0 0.0
    %379 = vmatprep.subr.mxu0 0.0
    %380 = vmatpush1.msra.mxu0 0.0
    %381 = vmatprep.mubr.f32.mxu0 0.0
    %382 = vmatmul.mubr.f32.gmra.mrb[0].mxu0 %v278
    %v383 = vpop.f32.mrb[0].mxu0
    %v384 = vadd.f32 %v315, %v383
    %v385 = vpop.f32.mrb[0].mxu0
    %386 = vmatprep.mubr.f32.mxu0 0.0
    %387 = vmatmul.mubr.f32.gmra.mrb[0].mxu0 %v279
    %v388 = vpop.f32.mrb[0].mxu0
    %v389 = vadd.f32 %v315, %v388
    %v390 = vpop.f32.mrb[0].mxu0
    %391 = vmatprep.mubr.f32.mxu0 0.0
    %392 = vmatmul.mubr.f32.gmra.mrb[0].mxu0 %v280
    %v393 = vpop.f32.mrb[0].mxu0
    %v394 = vadd.f32 %v315, %v393
    %v395 = vpop.f32.mrb[0].mxu0
    %396 = vmatprep.mubr.f32.mxu0 0.0
    %397 = vmatmul.mubr.f32.gmra.mrb[0].mxu0 %v281
    %v398 = vpop.f32.mrb[0].mxu0
    %v399 = vadd.f32 %v315, %v398
    %v400 = vpop.f32.mrb[0].mxu0
    %401 = vmatprep.mubr.f32.mxu0 0.0
    %402 = vmatmul.mubr.f32.gmra.mrb[0].mxu0 %v282
    %v403 = vpop.f32.mrb[0].mxu0
    %v404 = vadd.f32 %v315, %v403
    %v405 = vpop.f32.mrb[0].mxu0
    %406 = vmatprep.mubr.f32.mxu0 0.0
    %407 = vmatmul.mubr.f32.gmra.mrb[0].mxu0 %v283
    %v408 = vpop.f32.mrb[0].mxu0
    %v409 = vadd.f32 %v315, %v408
    %v410 = vpop.f32.mrb[0].mxu0
    %411 = vmatprep.mubr.f32.mxu0 0.0
    %412 = vmatmul.mubr.f32.gmra.mrb[0].mxu0 %v284
    %v413 = vpop.f32.mrb[0].mxu0
    %v414 = vadd.f32 %v315, %v413
    %v415 = vpop.f32.mrb[0].mxu0
    %416 = vmatprep.mubr.f32.mxu0 0.0
    %417 = vmatmul.mubr.f32.gmra.mrb[0].mxu0 %v285
    %v418 = vpop.f32.mrb[0].mxu0
    %v419 = vadd.f32 %v315, %v418
    %v420 = vpop.f32.mrb[0].mxu0
    %421 = vmatprep.mubr.f32.mxu0 0.0
    %422 = vmatmul.mubr.f32.gmra.mrb[0].mxu0 %v286
    %v423 = vpop.f32.mrb[0].mxu0
    %v424 = vadd.f32 %v315, %v423
    %v425 = vpop.f32.mrb[0].mxu0
    %426 = vmatprep.mubr.f32.mxu0 0.0
    %427 = vmatmul.mubr.f32.gmra.mrb[0].mxu0 %v287
    %v428 = vpop.f32.mrb[0].mxu0
    %v429 = vadd.f32 %v315, %v428
    %v430 = vpop.f32.mrb[0].mxu0
    %431 = vmatprep.mubr.f32.mxu0 0.0
    %432 = vmatmul.mubr.f32.gmra.mrb[0].mxu0 %v288
    %v433 = vpop.f32.mrb[0].mxu0
    %v434 = vadd.f32 %v315, %v433
    %v435 = vpop.f32.mrb[0].mxu0
    %436 = vmatprep.mubr.f32.mxu0 0.0
    %437 = vmatmul.mubr.f32.gmra.mrb[0].mxu0 %v289
    %v438 = vpop.f32.mrb[0].mxu0
    %v439 = vadd.f32 %v315, %v438
    %v440 = vpop.f32.mrb[0].mxu0
    %441 = vmatprep.mubr.f32.mxu0 0.0
    %442 = vmatmul.mubr.f32.gmra.mrb[0].mxu0 %v290
    %v443 = vpop.f32.mrb[0].mxu0
    %v444 = vadd.f32 %v315, %v443
    %v445 = vpop.f32.mrb[0].mxu0
    %446 = vmatprep.mubr.f32.mxu0 0.0
    %447 = vmatmul.mubr.f32.gmra.mrb[0].mxu0 %v291
    %v448 = vpop.f32.mrb[0].mxu0
    %v449 = vadd.f32 %v315, %v448
    %v450 = vpop.f32.mrb[0].mxu0
    %451 = vmatprep.mubr.f32.mxu0 0.0
    %452 = vmatmul.mubr.f32.gmra.mrb[0].mxu0 %v292
    %v453 = vpop.f32.mrb[0].mxu0
    %v454 = vadd.f32 %v315, %v453
    %v455 = vpop.f32.mrb[0].mxu0
    %456 = vmatprep.mubr.f32.mxu0 0.0
    %457 = vmatmul.mubr.f32.gmra.mrb[0].mxu0 %v293
    %v458 = vpop.f32.mrb[0].mxu0
    %v459 = vadd.f32 %v315, %v458
    %v460 = vpop.f32.mrb[0].mxu0
    %461 = vdwg.mxu0
    %v462 = vmax.f32 %v384, 0.0
    %v463 = vmax.f32 %v389, 0.0
    %v464 = vmax.f32 %v394, 0.0
    %v465 = vmax.f32 %v399, 0.0
    %v466 = vmax.f32 %v404, 0.0
    %v467 = vmax.f32 %v409, 0.0
    %v468 = vmax.f32 %v414, 0.0
    %v469 = vmax.f32 %v419, 0.0
    %v470 = vmax.f32 %v424, 0.0
    %v471 = vmax.f32 %v429, 0.0
    %v472 = vmax.f32 %v434, 0.0
    %v473 = vmax.f32 %v439, 0.0
    %v474 = vmax.f32 %v444, 0.0
    %v475 = vmax.f32 %v449, 0.0
    %v476 = vmax.f32 %v454, 0.0
    %v477 = vmax.f32 %v459, 0.0
    %v478 = vld [vmem:[#allocation8] sm:$0xff]
    %v479 = vld [vmem:[#allocation8 + $0x8] sm:$0xff]
    %v480 = vld [vmem:[#allocation8 + $0x10] sm:$0xff]
    %v481 = vld [vmem:[#allocation8 + $0x18] sm:$0xff]
    %v482 = vld [vmem:[#allocation8 + $0x20] sm:$0xff]
    %v483 = vld [vmem:[#allocation8 + $0x28] sm:$0xff]
    %v484 = vld [vmem:[#allocation8 + $0x30] sm:$0xff]
    %v485 = vld [vmem:[#allocation8 + $0x38] sm:$0xff]
    %v486 = vld [vmem:[#allocation8 + $0x40] sm:$0xff]
    %v487 = vld [vmem:[#allocation8 + $0x48] sm:$0xff]
    %v488 = vld [vmem:[#allocation8 + $0x50] sm:$0xff]
    %v489 = vld [vmem:[#allocation8 + $0x58] sm:$0xff]
    %v490 = vld [vmem:[#allocation8 + $0x60] sm:$0xff]
    %v491 = vld [vmem:[#allocation8 + $0x68] sm:$0xff]
    %v492 = vld [vmem:[#allocation8 + $0x70] sm:$0xff]
    %v493 = vld [vmem:[#allocation8 + $0x78] sm:$0xff]
    %v494 = vld [vmem:[%s5] sm:$0x1]
    %v496 = vlaneseq
    %v497 = vshrl.u32 %v496, 7
    %v498 = vsub.s32 0, %v497
    %v499 = vrot.slane %v494, %v498
    %501 = vmatprep.subr.mxu0 0.0
    %502 = vmatpush1.msra.mxu0 %v478
    %503 = vmatprep.subr.mxu0 0.0
    %504 = vmatpush1.msra.mxu0 %v479
    %505 = vmatprep.subr.mxu0 0.0
    %506 = vmatpush1.msra.mxu0 %v480
    %507 = vmatprep.subr.mxu0 0.0
    %508 = vmatpush1.msra.mxu0 %v481
    %509 = vmatprep.subr.mxu0 0.0
    %510 = vmatpush1.msra.mxu0 %v482
    %511 = vmatprep.subr.mxu0 0.0
    %512 = vmatpush1.msra.mxu0 %v483
    %513 = vmatprep.subr.mxu0 0.0
    %514 = vmatpush1.msra.mxu0 %v484
    %515 = vmatprep.subr.mxu0 0.0
    %516 = vmatpush1.msra.mxu0 %v485
    %517 = vmatprep.subr.mxu0 0.0
    %518 = vmatpush1.msra.mxu0 %v486
    %519 = vmatprep.subr.mxu0 0.0
    %520 = vmatpush1.msra.mxu0 %v487
    %521 = vmatprep.subr.mxu0 0.0
    %522 = vmatpush1.msra.mxu0 %v488
    %523 = vmatprep.subr.mxu0 0.0
    %524 = vmatpush1.msra.mxu0 %v489
    %525 = vmatprep.subr.mxu0 0.0
    %526 = vmatpush1.msra.mxu0 %v490
    %527 = vmatprep.subr.mxu0 0.0
    %528 = vmatpush1.msra.mxu0 %v491
    %529 = vmatprep.subr.mxu0 0.0
    %530 = vmatpush1.msra.mxu0 %v492
    %531 = vmatprep.subr.mxu0 0.0
    %532 = vmatpush1.msra.mxu0 %v493
    %533 = vmatprep.subr.mxu0 0.0
    %534 = vmatpush1.msra.mxu0 0.0
    %535 = vmatprep.subr.mxu0 0.0
    %536 = vmatpush1.msra.mxu0 0.0
    %537 = vmatprep.subr.mxu0 0.0
    %538 = vmatpush1.msra.mxu0 0.0
    %539 = vmatprep.subr.mxu0 0.0
    %540 = vmatpush1.msra.mxu0 0.0
    %541 = vmatprep.subr.mxu0 0.0
    %542 = vmatpush1.msra.mxu0 0.0
    %543 = vmatprep.subr.mxu0 0.0
    %544 = vmatpush1.msra.mxu0 0.0
    %545 = vmatprep.subr.mxu0 0.0
    %546 = vmatpush1.msra.mxu0 0.0
    %547 = vmatprep.subr.mxu0 0.0
    %548 = vmatpush1.msra.mxu0 0.0
    %549 = vmatprep.subr.mxu0 0.0
    %550 = vmatpush1.msra.mxu0 0.0
    %551 = vmatprep.subr.mxu0 0.0
    %552 = vmatpush1.msra.mxu0 0.0
    %553 = vmatprep.subr.mxu0 0.0
    %554 = vmatpush1.msra.mxu0 0.0
    %555 = vmatprep.subr.mxu0 0.0
    %556 = vmatpush1.msra.mxu0 0.0
    %557 = vmatprep.subr.mxu0 0.0
    %558 = vmatpush1.msra.mxu0 0.0
    %559 = vmatprep.subr.mxu0 0.0
    %560 = vmatpush1.msra.mxu0 0.0
    %561 = vmatprep.subr.mxu0 0.0
    %562 = vmatpush1.msra.mxu0 0.0
    %563 = vmatprep.subr.mxu0 0.0
    %564 = vmatpush1.msra.mxu0 0.0
    %565 = vmatprep.mubr.f32.mxu0 0.0
    %566 = vmatmul.mubr.f32.gmra.mrb[0].mxu0 %v462
    %v567 = vpop.f32.mrb[0].mxu0
    %v568 = vadd.f32 %v499, %v567
    %v569 = vpop.f32.mrb[0].mxu0
    %570 = vmatprep.mubr.f32.mxu0 0.0
    %571 = vmatmul.mubr.f32.gmra.mrb[0].mxu0 %v463
    %v572 = vpop.f32.mrb[0].mxu0
    %v573 = vadd.f32 %v499, %v572
    %v574 = vpop.f32.mrb[0].mxu0
    %575 = vmatprep.mubr.f32.mxu0 0.0
    %576 = vmatmul.mubr.f32.gmra.mrb[0].mxu0 %v464
    %v577 = vpop.f32.mrb[0].mxu0
    %v578 = vadd.f32 %v499, %v577
    %v579 = vpop.f32.mrb[0].mxu0
    %580 = vmatprep.mubr.f32.mxu0 0.0
    %581 = vmatmul.mubr.f32.gmra.mrb[0].mxu0 %v465
    %v582 = vpop.f32.mrb[0].mxu0
    %v583 = vadd.f32 %v499, %v582
    %v584 = vpop.f32.mrb[0].mxu0
    %585 = vmatprep.mubr.f32.mxu0 0.0
    %586 = vmatmul.mubr.f32.gmra.mrb[0].mxu0 %v466
    %v587 = vpop.f32.mrb[0].mxu0
    %v588 = vadd.f32 %v499, %v587
    %v589 = vpop.f32.mrb[0].mxu0
    %590 = vmatprep.mubr.f32.mxu0 0.0
    %591 = vmatmul.mubr.f32.gmra.mrb[0].mxu0 %v467
    %v592 = vpop.f32.mrb[0].mxu0
    %v593 = vadd.f32 %v499, %v592
    %v594 = vpop.f32.mrb[0].mxu0
    %595 = vmatprep.mubr.f32.mxu0 0.0
    %596 = vmatmul.mubr.f32.gmra.mrb[0].mxu0 %v468
    %v597 = vpop.f32.mrb[0].mxu0
    %v598 = vadd.f32 %v499, %v597
    %v599 = vpop.f32.mrb[0].mxu0
    %600 = vmatprep.mubr.f32.mxu0 0.0
    %601 = vmatmul.mubr.f32.gmra.mrb[0].mxu0 %v469
    %v602 = vpop.f32.mrb[0].mxu0
    %v603 = vadd.f32 %v499, %v602
    %v604 = vpop.f32.mrb[0].mxu0
    %605 = vmatprep.mubr.f32.mxu0 0.0
    %606 = vmatmul.mubr.f32.gmra.mrb[0].mxu0 %v470
    %v607 = vpop.f32.mrb[0].mxu0
    %v608 = vadd.f32 %v499, %v607
    %v609 = vpop.f32.mrb[0].mxu0
    %610 = vmatprep.mubr.f32.mxu0 0.0
    %611 = vmatmul.mubr.f32.gmra.mrb[0].mxu0 %v471
    %v612 = vpop.f32.mrb[0].mxu0
    %v613 = vadd.f32 %v499, %v612
    %v614 = vpop.f32.mrb[0].mxu0
    %615 = vmatprep.mubr.f32.mxu0 0.0
    %616 = vmatmul.mubr.f32.gmra.mrb[0].mxu0 %v472
    %v617 = vpop.f32.mrb[0].mxu0
    %v618 = vadd.f32 %v499, %v617
    %v619 = vpop.f32.mrb[0].mxu0
    %620 = vmatprep.mubr.f32.mxu0 0.0
    %621 = vmatmul.mubr.f32.gmra.mrb[0].mxu0 %v473
    %v622 = vpop.f32.mrb[0].mxu0
    %v623 = vadd.f32 %v499, %v622
    %v624 = vpop.f32.mrb[0].mxu0
    %625 = vmatprep.mubr.f32.mxu0 0.0
    %626 = vmatmul.mubr.f32.gmra.mrb[0].mxu0 %v474
    %v627 = vpop.f32.mrb[0].mxu0
    %v628 = vadd.f32 %v499, %v627
    %v629 = vpop.f32.mrb[0].mxu0
    %630 = vmatprep.mubr.f32.mxu0 0.0
    %631 = vmatmul.mubr.f32.gmra.mrb[0].mxu0 %v475
    %v632 = vpop.f32.mrb[0].mxu0
    %v633 = vadd.f32 %v499, %v632
    %v634 = vpop.f32.mrb[0].mxu0
    %635 = vmatprep.mubr.f32.mxu0 0.0
    %636 = vmatmul.mubr.f32.gmra.mrb[0].mxu0 %v476
    %v637 = vpop.f32.mrb[0].mxu0
    %v638 = vadd.f32 %v499, %v637
    %v639 = vpop.f32.mrb[0].mxu0
    %640 = vmatprep.mubr.f32.mxu0 0.0
    %641 = vmatmul.mubr.f32.gmra.mrb[0].mxu0 %v477
    %v642 = vpop.f32.mrb[0].mxu0
    %v643 = vadd.f32 %v499, %v642
    %v644 = vpop.f32.mrb[0].mxu0
    %645 = vdwg.mxu0
    %v646 = vld [vmem:[%s6] sm:$0x1]
    %v648 = vlaneseq
    %v649 = vshrl.u32 %v648, 7
    %v650 = vsub.s32 0, %v649
    %v651 = vrot.slane %v646, %v650
    %v653 = vmul.f32 %v568, %v651
    %v654 = vmul.f32 %v573, %v651
    %v655 = vmul.f32 %v578, %v651
    %v656 = vmul.f32 %v583, %v651
    %v657 = vmul.f32 %v588, %v651
    %v658 = vmul.f32 %v593, %v651
    %v659 = vmul.f32 %v598, %v651
    %v660 = vmul.f32 %v603, %v651
    %v661 = vmul.f32 %v608, %v651
    %v662 = vmul.f32 %v613, %v651
    %v663 = vmul.f32 %v618, %v651
    %v664 = vmul.f32 %v623, %v651
    %v665 = vmul.f32 %v628, %v651
    %v666 = vmul.f32 %v633, %v651
    %v667 = vmul.f32 %v638, %v651
    %v668 = vmul.f32 %v643, %v651
    %v669 = vld [vmem:[%s7] sm:$0x1]
    %v671 = vlaneseq
    %v672 = vshrl.u32 %v671, 7
    %v673 = vsub.s32 0, %v672
    %v674 = vrot.slane %v669, %v673
    %v676 = vadd.f32 %v653, %v674
    %v677 = vadd.f32 %v654, %v674
    %v678 = vadd.f32 %v655, %v674
    %v679 = vadd.f32 %v656, %v674
    %v680 = vadd.f32 %v657, %v674
    %v681 = vadd.f32 %v658, %v674
    %v682 = vadd.f32 %v659, %v674
    %v683 = vadd.f32 %v660, %v674
    %v684 = vadd.f32 %v661, %v674
    %v685 = vadd.f32 %v662, %v674
    %v686 = vadd.f32 %v663, %v674
    %v687 = vadd.f32 %v664, %v674
    %v688 = vadd.f32 %v665, %v674
    %v689 = vadd.f32 %v666, %v674
    %v690 = vadd.f32 %v667, %v674
    %v691 = vadd.f32 %v668, %v674
    %v692 = vmax.f32 %v676, 0.0
    %v693 = vmax.f32 %v677, 0.0
    %v694 = vmax.f32 %v678, 0.0
    %v695 = vmax.f32 %v679, 0.0
    %v696 = vmax.f32 %v680, 0.0
    %v697 = vmax.f32 %v681, 0.0
    %v698 = vmax.f32 %v682, 0.0
    %v699 = vmax.f32 %v683, 0.0
    %v700 = vmax.f32 %v684, 0.0
    %v701 = vmax.f32 %v685, 0.0
    %v702 = vmax.f32 %v686, 0.0
    %v703 = vmax.f32 %v687, 0.0
    %v704 = vmax.f32 %v688, 0.0
    %v705 = vmax.f32 %v689, 0.0
    %v706 = vmax.f32 %v690, 0.0
    %v707 = vmax.f32 %v691, 0.0
    %708 = vmatprep.subr.mxu0 0.0
    %709 = vmatpush1.msra.mxu0 %v692
    %710 = vmatprep.subr.mxu0 0.0
    %711 = vmatpush1.msra.mxu0 %v693
    %712 = vmatprep.subr.mxu0 0.0
    %713 = vmatpush1.msra.mxu0 %v694
    %714 = vmatprep.subr.mxu0 0.0
    %715 = vmatpush1.msra.mxu0 %v695
    %716 = vmatprep.subr.mxu0 0.0
    %717 = vmatpush1.msra.mxu0 %v696
    %718 = vmatprep.subr.mxu0 0.0
    %719 = vmatpush1.msra.mxu0 %v697
    %720 = vmatprep.subr.mxu0 0.0
    %721 = vmatpush1.msra.mxu0 %v698
    %722 = vmatprep.subr.mxu0 0.0
    %723 = vmatpush1.msra.mxu0 %v699
    %724 = vmatprep.subr.mxu0 0.0
    %725 = vmatpush1.msra.mxu0 %v700
    %726 = vmatprep.subr.mxu0 0.0
    %727 = vmatpush1.msra.mxu0 %v701
    %728 = vmatprep.subr.mxu0 0.0
    %729 = vmatpush1.msra.mxu0 %v702
    %730 = vmatprep.subr.mxu0 0.0
    %731 = vmatpush1.msra.mxu0 %v703
    %732 = vmatprep.subr.mxu0 0.0
    %733 = vmatpush1.msra.mxu0 %v704
    %734 = vmatprep.subr.mxu0 0.0
    %735 = vmatpush1.msra.mxu0 %v705
    %736 = vmatprep.subr.mxu0 0.0
    %737 = vmatpush1.msra.mxu0 %v706
    %738 = vmatprep.subr.mxu0 0.0
    %739 = vmatpush1.msra.mxu0 %v707
    %740 = vmatprep.subr.mxu0 0.0
    %741 = vmatpush1.msra.mxu0 0.0
    %742 = vmatprep.subr.mxu0 0.0
    %743 = vmatpush1.msra.mxu0 0.0
    %744 = vmatprep.subr.mxu0 0.0
    %745 = vmatpush1.msra.mxu0 0.0
    %746 = vmatprep.subr.mxu0 0.0
    %747 = vmatpush1.msra.mxu0 0.0
    %748 = vmatprep.subr.mxu0 0.0
    %749 = vmatpush1.msra.mxu0 0.0
    %750 = vmatprep.subr.mxu0 0.0
    %751 = vmatpush1.msra.mxu0 0.0
    %752 = vmatprep.subr.mxu0 0.0
    %753 = vmatpush1.msra.mxu0 0.0
    %754 = vmatprep.subr.mxu0 0.0
    %755 = vmatpush1.msra.mxu0 0.0
    %756 = vmatprep.subr.mxu0 0.0
    %757 = vmatpush1.msra.mxu0 0.0
    %758 = vmatprep.subr.mxu0 0.0
    %759 = vmatpush1.msra.mxu0 0.0
    %760 = vmatprep.subr.mxu0 0.0
    %761 = vmatpush1.msra.mxu0 0.0
    %762 = vmatprep.subr.mxu0 0.0
    %763 = vmatpush1.msra.mxu0 0.0
    %764 = vmatprep.subr.mxu0 0.0
    %765 = vmatpush1.msra.mxu0 0.0
    %766 = vmatprep.subr.mxu0 0.0
    %767 = vmatpush1.msra.mxu0 0.0
    %768 = vmatprep.subr.mxu0 0.0
    %769 = vmatpush1.msra.mxu0 0.0
    %770 = vmatprep.subr.mxu0 0.0
    %771 = vmatpush1.msra.mxu0 0.0
    %772 = vmatprep.mubr.f32.mxu0 0.0
    %773 = vmatmul.mubr.f32.gmra.mrb[0].mxu0 %v101
    %v774 = vpop.f32.mrb[0].mxu0
    %v775 = vadd.f32 0.0, %v774
    %v776 = vpop.f32.mrb[0].mxu0
    %777 = vmatprep.mubr.f32.mxu0 0.0
    %778 = vmatmul.mubr.f32.gmra.mrb[0].mxu0 %v102
    %v779 = vpop.f32.mrb[0].mxu0
    %v780 = vadd.f32 0.0, %v779
    %v781 = vpop.f32.mrb[0].mxu0
    %782 = vmatprep.mubr.f32.mxu0 0.0
    %783 = vmatmul.mubr.f32.gmra.mrb[0].mxu0 %v103
    %v784 = vpop.f32.mrb[0].mxu0
    %v785 = vadd.f32 0.0, %v784
    %v786 = vpop.f32.mrb[0].mxu0
    %787 = vmatprep.mubr.f32.mxu0 0.0
    %788 = vmatmul.mubr.f32.gmra.mrb[0].mxu0 %v104
    %v789 = vpop.f32.mrb[0].mxu0
    %v790 = vadd.f32 0.0, %v789
    %v791 = vpop.f32.mrb[0].mxu0
    %792 = vmatprep.mubr.f32.mxu0 0.0
    %793 = vmatmul.mubr.f32.gmra.mrb[0].mxu0 %v105
    %v794 = vpop.f32.mrb[0].mxu0
    %v795 = vadd.f32 0.0, %v794
    %v796 = vpop.f32.mrb[0].mxu0
    %797 = vmatprep.mubr.f32.mxu0 0.0
    %798 = vmatmul.mubr.f32.gmra.mrb[0].mxu0 %v106
    %v799 = vpop.f32.mrb[0].mxu0
    %v800 = vadd.f32 0.0, %v799
    %v801 = vpop.f32.mrb[0].mxu0
    %802 = vmatprep.mubr.f32.mxu0 0.0
    %803 = vmatmul.mubr.f32.gmra.mrb[0].mxu0 %v107
    %v804 = vpop.f32.mrb[0].mxu0
    %v805 = vadd.f32 0.0, %v804
    %v806 = vpop.f32.mrb[0].mxu0
    %807 = vmatprep.mubr.f32.mxu0 0.0
    %808 = vmatmul.mubr.f32.gmra.mrb[0].mxu0 %v108
    %v809 = vpop.f32.mrb[0].mxu0
    %v810 = vadd.f32 0.0, %v809
    %v811 = vpop.f32.mrb[0].mxu0
    %812 = vmatprep.mubr.f32.mxu0 0.0
    %813 = vmatmul.mubr.f32.gmra.mrb[0].mxu0 %v109
    %v814 = vpop.f32.mrb[0].mxu0
    %v815 = vadd.f32 0.0, %v814
    %v816 = vpop.f32.mrb[0].mxu0
    %817 = vmatprep.mubr.f32.mxu0 0.0
    %818 = vmatmul.mubr.f32.gmra.mrb[0].mxu0 %v110
    %v819 = vpop.f32.mrb[0].mxu0
    %v820 = vadd.f32 0.0, %v819
    %v821 = vpop.f32.mrb[0].mxu0
    %822 = vmatprep.mubr.f32.mxu0 0.0
    %823 = vmatmul.mubr.f32.gmra.mrb[0].mxu0 %v111
    %v824 = vpop.f32.mrb[0].mxu0
    %v825 = vadd.f32 0.0, %v824
    %v826 = vpop.f32.mrb[0].mxu0
    %827 = vmatprep.mubr.f32.mxu0 0.0
    %828 = vmatmul.mubr.f32.gmra.mrb[0].mxu0 %v112
    %v829 = vpop.f32.mrb[0].mxu0
    %v830 = vadd.f32 0.0, %v829
    %v831 = vpop.f32.mrb[0].mxu0
    %832 = vmatprep.mubr.f32.mxu0 0.0
    %833 = vmatmul.mubr.f32.gmra.mrb[0].mxu0 %v113
    %v834 = vpop.f32.mrb[0].mxu0
    %v835 = vadd.f32 0.0, %v834
    %v836 = vpop.f32.mrb[0].mxu0
    %837 = vmatprep.mubr.f32.mxu0 0.0
    %838 = vmatmul.mubr.f32.gmra.mrb[0].mxu0 %v114
    %v839 = vpop.f32.mrb[0].mxu0
    %v840 = vadd.f32 0.0, %v839
    %v841 = vpop.f32.mrb[0].mxu0
    %842 = vmatprep.mubr.f32.mxu0 0.0
    %843 = vmatmul.mubr.f32.gmra.mrb[0].mxu0 %v115
    %v844 = vpop.f32.mrb[0].mxu0
    %v845 = vadd.f32 0.0, %v844
    %v846 = vpop.f32.mrb[0].mxu0
    %847 = vmatprep.mubr.f32.mxu0 0.0
    %848 = vmatmul.mubr.f32.gmra.mrb[0].mxu0 %v116
    %v849 = vpop.f32.mrb[0].mxu0
    %v850 = vadd.f32 0.0, %v849
    %v851 = vpop.f32.mrb[0].mxu0
    %852 = vdwg.mxu0
    %v853 = vadd.f32 %v692, %v775
    %v854 = vadd.f32 %v693, %v780
    %v855 = vadd.f32 %v694, %v785
    %v856 = vadd.f32 %v695, %v790
    %v857 = vadd.f32 %v696, %v795
    %v858 = vadd.f32 %v697, %v800
    %v859 = vadd.f32 %v698, %v805
    %v860 = vadd.f32 %v699, %v810
    %v861 = vadd.f32 %v700, %v815
    %v862 = vadd.f32 %v701, %v820
    %v863 = vadd.f32 %v702, %v825
    %v864 = vadd.f32 %v703, %v830
    %v865 = vadd.f32 %v704, %v835
    %v866 = vadd.f32 %v705, %v840
    %v867 = vadd.f32 %v706, %v845
    %v868 = vadd.f32 %v707, %v850
    %s869 = scalar_lea.vmem [#allocation7], 128
    %v870 = vld [vmem:[%s869] sm:$0xff]
    %v871 = vld [vmem:[%s869 + $0x8] sm:$0xff]
    %v872 = vld [vmem:[%s869 + $0x10] sm:$0xff]
    %v873 = vld [vmem:[%s869 + $0x18] sm:$0xff]
    %v874 = vld [vmem:[%s869 + $0x20] sm:$0xff]
    %v875 = vld [vmem:[%s869 + $0x28] sm:$0xff]
    %v876 = vld [vmem:[%s869 + $0x30] sm:$0xff]
    %v877 = vld [vmem:[%s869 + $0x38] sm:$0xff]
    %v878 = vld [vmem:[%s869 + $0x40] sm:$0xff]
    %v879 = vld [vmem:[%s869 + $0x48] sm:$0xff]
    %v880 = vld [vmem:[%s869 + $0x50] sm:$0xff]
    %v881 = vld [vmem:[%s869 + $0x58] sm:$0xff]
    %v882 = vld [vmem:[%s869 + $0x60] sm:$0xff]
    %v883 = vld [vmem:[%s869 + $0x68] sm:$0xff]
    %v884 = vld [vmem:[%s869 + $0x70] sm:$0xff]
    %v885 = vld [vmem:[%s869 + $0x78] sm:$0xff]
    %s886 = scalar_lea.vmem %s3, 1
    %v887 = vld [vmem:[%s886] sm:$0x1]
    %v889 = vlaneseq
    %v890 = vshrl.u32 %v889, 7
    %v891 = vsub.s32 0, %v890
    %v892 = vrot.slane %v887, %v891
    %894 = vmatprep.subr.mxu0 0.0
    %895 = vmatpush1.msra.mxu0 %v870
    %896 = vmatprep.subr.mxu0 0.0
    %897 = vmatpush1.msra.mxu0 %v871
    %898 = vmatprep.subr.mxu0 0.0
    %899 = vmatpush1.msra.mxu0 %v872
    %900 = vmatprep.subr.mxu0 0.0
    %901 = vmatpush1.msra.mxu0 %v873
    %902 = vmatprep.subr.mxu0 0.0
    %903 = vmatpush1.msra.mxu0 %v874
    %904 = vmatprep.subr.mxu0 0.0
    %905 = vmatpush1.msra.mxu0 %v875
    %906 = vmatprep.subr.mxu0 0.0
    %907 = vmatpush1.msra.mxu0 %v876
    %908 = vmatprep.subr.mxu0 0.0
    %909 = vmatpush1.msra.mxu0 %v877
    %910 = vmatprep.subr.mxu0 0.0
    %911 = vmatpush1.msra.mxu0 %v878
    %912 = vmatprep.subr.mxu0 0.0
    %913 = vmatpush1.msra.mxu0 %v879
    %914 = vmatprep.subr.mxu0 0.0
    %915 = vmatpush1.msra.mxu0 %v880
    %916 = vmatprep.subr.mxu0 0.0
    %917 = vmatpush1.msra.mxu0 %v881
    %918 = vmatprep.subr.mxu0 0.0
    %919 = vmatpush1.msra.mxu0 %v882
    %920 = vmatprep.subr.mxu0 0.0
    %921 = vmatpush1.msra.mxu0 %v883
    %922 = vmatprep.subr.mxu0 0.0
    %923 = vmatpush1.msra.mxu0 %v884
    %924 = vmatprep.subr.mxu0 0.0
    %925 = vmatpush1.msra.mxu0 %v885
    %926 = vmatprep.subr.mxu0 0.0
    %927 = vmatpush1.msra.mxu0 0.0
    %928 = vmatprep.subr.mxu0 0.0
    %929 = vmatpush1.msra.mxu0 0.0
    %930 = vmatprep.subr.mxu0 0.0
    %931 = vmatpush1.msra.mxu0 0.0
    %932 = vmatprep.subr.mxu0 0.0
    %933 = vmatpush1.msra.mxu0 0.0
    %934 = vmatprep.subr.mxu0 0.0
    %935 = vmatpush1.msra.mxu0 0.0
    %936 = vmatprep.subr.mxu0 0.0
    %937 = vmatpush1.msra.mxu0 0.0
    %938 = vmatprep.subr.mxu0 0.0
    %939 = vmatpush1.msra.mxu0 0.0
    %940 = vmatprep.subr.mxu0 0.0
    %941 = vmatpush1.msra.mxu0 0.0
    %942 = vmatprep.subr.mxu0 0.0
    %943 = vmatpush1.msra.mxu0 0.0
    %944 = vmatprep.subr.mxu0 0.0
    %945 = vmatpush1.msra.mxu0 0.0
    %946 = vmatprep.subr.mxu0 0.0
    %947 = vmatpush1.msra.mxu0 0.0
    %948 = vmatprep.subr.mxu0 0.0
    %949 = vmatpush1.msra.mxu0 0.0
    %950 = vmatprep.subr.mxu0 0.0
    %951 = vmatpush1.msra.mxu0 0.0
    %952 = vmatprep.subr.mxu0 0.0
    %953 = vmatpush1.msra.mxu0 0.0
    %954 = vmatprep.subr.mxu0 0.0
    %955 = vmatpush1.msra.mxu0 0.0
    %956 = vmatprep.subr.mxu0 0.0
    %957 = vmatpush1.msra.mxu0 0.0
    %958 = vmatprep.mubr.f32.mxu0 0.0
    %959 = vmatmul.mubr.f32.gmra.mrb[0].mxu0 %v853
    %v960 = vpop.f32.mrb[0].mxu0
    %v961 = vadd.f32 %v892, %v960
    %v962 = vpop.f32.mrb[0].mxu0
    %963 = vmatprep.mubr.f32.mxu0 0.0
    %964 = vmatmul.mubr.f32.gmra.mrb[0].mxu0 %v854
    %v965 = vpop.f32.mrb[0].mxu0
    %v966 = vadd.f32 %v892, %v965
    %v967 = vpop.f32.mrb[0].mxu0
    %968 = vmatprep.mubr.f32.mxu0 0.0
    %969 = vmatmul.mubr.f32.gmra.mrb[0].mxu0 %v855
    %v970 = vpop.f32.mrb[0].mxu0
    %v971 = vadd.f32 %v892, %v970
    %v972 = vpop.f32.mrb[0].mxu0
    %973 = vmatprep.mubr.f32.mxu0 0.0
    %974 = vmatmul.mubr.f32.gmra.mrb[0].mxu0 %v856
    %v975 = vpop.f32.mrb[0].mxu0
    %v976 = vadd.f32 %v892, %v975
    %v977 = vpop.f32.mrb[0].mxu0
    %978 = vmatprep.mubr.f32.mxu0 0.0
    %979 = vmatmul.mubr.f32.gmra.mrb[0].mxu0 %v857
    %v980 = vpop.f32.mrb[0].mxu0
    %v981 = vadd.f32 %v892, %v980
    %v982 = vpop.f32.mrb[0].mxu0
    %983 = vmatprep.mubr.f32.mxu0 0.0
    %984 = vmatmul.mubr.f32.gmra.mrb[0].mxu0 %v858
    %v985 = vpop.f32.mrb[0].mxu0
    %v986 = vadd.f32 %v892, %v985
    %v987 = vpop.f32.mrb[0].mxu0
    %988 = vmatprep.mubr.f32.mxu0 0.0
    %989 = vmatmul.mubr.f32.gmra.mrb[0].mxu0 %v859
    %v990 = vpop.f32.mrb[0].mxu0
    %v991 = vadd.f32 %v892, %v990
    %v992 = vpop.f32.mrb[0].mxu0
    %993 = vmatprep.mubr.f32.mxu0 0.0
    %994 = vmatmul.mubr.f32.gmra.mrb[0].mxu0 %v860
    %v995 = vpop.f32.mrb[0].mxu0
    %v996 = vadd.f32 %v892, %v995
    %v997 = vpop.f32.mrb[0].mxu0
    %998 = vmatprep.mubr.f32.mxu0 0.0
    %999 = vmatmul.mubr.f32.gmra.mrb[0].mxu0 %v861
    %v1000 = vpop.f32.mrb[0].mxu0
    %v1001 = vadd.f32 %v892, %v1000
    %v1002 = vpop.f32.mrb[0].mxu0
    %1003 = vmatprep.mubr.f32.mxu0 0.0
    %1004 = vmatmul.mubr.f32.gmra.mrb[0].mxu0 %v862
    %v1005 = vpop.f32.mrb[0].mxu0
    %v1006 = vadd.f32 %v892, %v1005
    %v1007 = vpop.f32.mrb[0].mxu0
    %1008 = vmatprep.mubr.f32.mxu0 0.0
    %1009 = vmatmul.mubr.f32.gmra.mrb[0].mxu0 %v863
    %v1010 = vpop.f32.mrb[0].mxu0
    %v1011 = vadd.f32 %v892, %v1010
    %v1012 = vpop.f32.mrb[0].mxu0
    %1013 = vmatprep.mubr.f32.mxu0 0.0
    %1014 = vmatmul.mubr.f32.gmra.mrb[0].mxu0 %v864
    %v1015 = vpop.f32.mrb[0].mxu0
    %v1016 = vadd.f32 %v892, %v1015
    %v1017 = vpop.f32.mrb[0].mxu0
    %1018 = vmatprep.mubr.f32.mxu0 0.0
    %1019 = vmatmul.mubr.f32.gmra.mrb[0].mxu0 %v865
    %v1020 = vpop.f32.mrb[0].mxu0
    %v1021 = vadd.f32 %v892, %v1020
    %v1022 = vpop.f32.mrb[0].mxu0
    %1023 = vmatprep.mubr.f32.mxu0 0.0
    %1024 = vmatmul.mubr.f32.gmra.mrb[0].mxu0 %v866
    %v1025 = vpop.f32.mrb[0].mxu0
    %v1026 = vadd.f32 %v892, %v1025
    %v1027 = vpop.f32.mrb[0].mxu0
    %1028 = vmatprep.mubr.f32.mxu0 0.0
    %1029 = vmatmul.mubr.f32.gmra.mrb[0].mxu0 %v867
    %v1030 = vpop.f32.mrb[0].mxu0
    %v1031 = vadd.f32 %v892, %v1030
    %v1032 = vpop.f32.mrb[0].mxu0
    %1033 = vmatprep.mubr.f32.mxu0 0.0
    %1034 = vmatmul.mubr.f32.gmra.mrb[0].mxu0 %v868
    %v1035 = vpop.f32.mrb[0].mxu0
    %v1036 = vadd.f32 %v892, %v1035
    %v1037 = vpop.f32.mrb[0].mxu0
    %1038 = vdwg.mxu0
    %v1039 = vmax.f32 %v961, 0.0
    %v1040 = vmax.f32 %v966, 0.0
    %v1041 = vmax.f32 %v971, 0.0
    %v1042 = vmax.f32 %v976, 0.0
    %v1043 = vmax.f32 %v981, 0.0
    %v1044 = vmax.f32 %v986, 0.0
    %v1045 = vmax.f32 %v991, 0.0
    %v1046 = vmax.f32 %v996, 0.0
    %v1047 = vmax.f32 %v1001, 0.0
    %v1048 = vmax.f32 %v1006, 0.0
    %v1049 = vmax.f32 %v1011, 0.0
    %v1050 = vmax.f32 %v1016, 0.0
    %v1051 = vmax.f32 %v1021, 0.0
    %v1052 = vmax.f32 %v1026, 0.0
    %v1053 = vmax.f32 %v1031, 0.0
    %v1054 = vmax.f32 %v1036, 0.0
    %s1055 = scalar_lea.vmem [#allocation8], 128
    %v1056 = vld [vmem:[%s1055] sm:$0xff]
    %v1057 = vld [vmem:[%s1055 + $0x8] sm:$0xff]
    %v1058 = vld [vmem:[%s1055 + $0x10] sm:$0xff]
    %v1059 = vld [vmem:[%s1055 + $0x18] sm:$0xff]
    %v1060 = vld [vmem:[%s1055 + $0x20] sm:$0xff]
    %v1061 = vld [vmem:[%s1055 + $0x28] sm:$0xff]
    %v1062 = vld [vmem:[%s1055 + $0x30] sm:$0xff]
    %v1063 = vld [vmem:[%s1055 + $0x38] sm:$0xff]
    %v1064 = vld [vmem:[%s1055 + $0x40] sm:$0xff]
    %v1065 = vld [vmem:[%s1055 + $0x48] sm:$0xff]
    %v1066 = vld [vmem:[%s1055 + $0x50] sm:$0xff]
    %v1067 = vld [vmem:[%s1055 + $0x58] sm:$0xff]
    %v1068 = vld [vmem:[%s1055 + $0x60] sm:$0xff]
    %v1069 = vld [vmem:[%s1055 + $0x68] sm:$0xff]
    %v1070 = vld [vmem:[%s1055 + $0x70] sm:$0xff]
    %v1071 = vld [vmem:[%s1055 + $0x78] sm:$0xff]
    %s1072 = scalar_lea.vmem %s5, 1
    %v1073 = vld [vmem:[%s1072] sm:$0x1]
    %v1075 = vlaneseq
    %v1076 = vshrl.u32 %v1075, 7
    %v1077 = vsub.s32 0, %v1076
    %v1078 = vrot.slane %v1073, %v1077
    %1080 = vmatprep.subr.mxu0 0.0
    %1081 = vmatpush1.msra.mxu0 %v1056
    %1082 = vmatprep.subr.mxu0 0.0
    %1083 = vmatpush1.msra.mxu0 %v1057
    %1084 = vmatprep.subr.mxu0 0.0
    %1085 = vmatpush1.msra.mxu0 %v1058
    %1086 = vmatprep.subr.mxu0 0.0
    %1087 = vmatpush1.msra.mxu0 %v1059
    %1088 = vmatprep.subr.mxu0 0.0
    %1089 = vmatpush1.msra.mxu0 %v1060
    %1090 = vmatprep.subr.mxu0 0.0
    %1091 = vmatpush1.msra.mxu0 %v1061
    %1092 = vmatprep.subr.mxu0 0.0
    %1093 = vmatpush1.msra.mxu0 %v1062
    %1094 = vmatprep.subr.mxu0 0.0
    %1095 = vmatpush1.msra.mxu0 %v1063
    %1096 = vmatprep.subr.mxu0 0.0
    %1097 = vmatpush1.msra.mxu0 %v1064
    %1098 = vmatprep.subr.mxu0 0.0
    %1099 = vmatpush1.msra.mxu0 %v1065
    %1100 = vmatprep.subr.mxu0 0.0
    %1101 = vmatpush1.msra.mxu0 %v1066
    %1102 = vmatprep.subr.mxu0 0.0
    %1103 = vmatpush1.msra.mxu0 %v1067
    %1104 = vmatprep.subr.mxu0 0.0
    %1105 = vmatpush1.msra.mxu0 %v1068
    %1106 = vmatprep.subr.mxu0 0.0
    %1107 = vmatpush1.msra.mxu0 %v1069
    %1108 = vmatprep.subr.mxu0 0.0
    %1109 = vmatpush1.msra.mxu0 %v1070
    %1110 = vmatprep.subr.mxu0 0.0
    %1111 = vmatpush1.msra.mxu0 %v1071
    %1112 = vmatprep.subr.mxu0 0.0
    %1113 = vmatpush1.msra.mxu0 0.0
    %1114 = vmatprep.subr.mxu0 0.0
    %1115 = vmatpush1.msra.mxu0 0.0
    %1116 = vmatprep.subr.mxu0 0.0
    %1117 = vmatpush1.msra.mxu0 0.0
    %1118 = vmatprep.subr.mxu0 0.0
    %1119 = vmatpush1.msra.mxu0 0.0
    %1120 = vmatprep.subr.mxu0 0.0
    %1121 = vmatpush1.msra.mxu0 0.0
    %1122 = vmatprep.subr.mxu0 0.0
    %1123 = vmatpush1.msra.mxu0 0.0
    %1124 = vmatprep.subr.mxu0 0.0
    %1125 = vmatpush1.msra.mxu0 0.0
    %1126 = vmatprep.subr.mxu0 0.0
    %1127 = vmatpush1.msra.mxu0 0.0
    %1128 = vmatprep.subr.mxu0 0.0
    %1129 = vmatpush1.msra.mxu0 0.0
    %1130 = vmatprep.subr.mxu0 0.0
    %1131 = vmatpush1.msra.mxu0 0.0
    %1132 = vmatprep.subr.mxu0 0.0
    %1133 = vmatpush1.msra.mxu0 0.0
    %1134 = vmatprep.subr.mxu0 0.0
    %1135 = vmatpush1.msra.mxu0 0.0
    %1136 = vmatprep.subr.mxu0 0.0
    %1137 = vmatpush1.msra.mxu0 0.0
    %1138 = vmatprep.subr.mxu0 0.0
    %1139 = vmatpush1.msra.mxu0 0.0
    %1140 = vmatprep.subr.mxu0 0.0
    %1141 = vmatpush1.msra.mxu0 0.0
    %1142 = vmatprep.subr.mxu0 0.0
    %1143 = vmatpush1.msra.mxu0 0.0
    %1144 = vmatprep.mubr.f32.mxu0 0.0
    %1145 = vmatmul.mubr.f32.gmra.mrb[0].mxu0 %v1039
    %v1146 = vpop.f32.mrb[0].mxu0
    %v1147 = vadd.f32 %v1078, %v1146
    %v1148 = vpop.f32.mrb[0].mxu0
    %1149 = vmatprep.mubr.f32.mxu0 0.0
    %1150 = vmatmul.mubr.f32.gmra.mrb[0].mxu0 %v1040
    %v1151 = vpop.f32.mrb[0].mxu0
    %v1152 = vadd.f32 %v1078, %v1151
    %v1153 = vpop.f32.mrb[0].mxu0
    %1154 = vmatprep.mubr.f32.mxu0 0.0
    %1155 = vmatmul.mubr.f32.gmra.mrb[0].mxu0 %v1041
    %v1156 = vpop.f32.mrb[0].mxu0
    %v1157 = vadd.f32 %v1078, %v1156
    %v1158 = vpop.f32.mrb[0].mxu0
    %1159 = vmatprep.mubr.f32.mxu0 0.0
    %1160 = vmatmul.mubr.f32.gmra.mrb[0].mxu0 %v1042
    %v1161 = vpop.f32.mrb[0].mxu0
    %v1162 = vadd.f32 %v1078, %v1161
    %v1163 = vpop.f32.mrb[0].mxu0
    %1164 = vmatprep.mubr.f32.mxu0 0.0
    %1165 = vmatmul.mubr.f32.gmra.mrb[0].mxu0 %v1043
    %v1166 = vpop.f32.mrb[0].mxu0
    %v1167 = vadd.f32 %v1078, %v1166
    %v1168 = vpop.f32.mrb[0].mxu0
    %1169 = vmatprep.mubr.f32.mxu0 0.0
    %1170 = vmatmul.mubr.f32.gmra.mrb[0].mxu0 %v1044
    %v1171 = vpop.f32.mrb[0].mxu0
    %v1172 = vadd.f32 %v1078, %v1171
    %v1173 = vpop.f32.mrb[0].mxu0
    %1174 = vmatprep.mubr.f32.mxu0 0.0
    %1175 = vmatmul.mubr.f32.gmra.mrb[0].mxu0 %v1045
    %v1176 = vpop.f32.mrb[0].mxu0
    %v1177 = vadd.f32 %v1078, %v1176
    %v1178 = vpop.f32.mrb[0].mxu0
    %1179 = vmatprep.mubr.f32.mxu0 0.0
    %1180 = vmatmul.mubr.f32.gmra.mrb[0].mxu0 %v1046
    %v1181 = vpop.f32.mrb[0].mxu0
    %v1182 = vadd.f32 %v1078, %v1181
    %v1183 = vpop.f32.mrb[0].mxu0
    %1184 = vmatprep.mubr.f32.mxu0 0.0
    %1185 = vmatmul.mubr.f32.gmra.mrb[0].mxu0 %v1047
    %v1186 = vpop.f32.mrb[0].mxu0
    %v1187 = vadd.f32 %v1078, %v1186
    %v1188 = vpop.f32.mrb[0].mxu0
    %1189 = vmatprep.mubr.f32.mxu0 0.0
    %1190 = vmatmul.mubr.f32.gmra.mrb[0].mxu0 %v1048
    %v1191 = vpop.f32.mrb[0].mxu0
    %v1192 = vadd.f32 %v1078, %v1191
    %v1193 = vpop.f32.mrb[0].mxu0
    %1194 = vmatprep.mubr.f32.mxu0 0.0
    %1195 = vmatmul.mubr.f32.gmra.mrb[0].mxu0 %v1049
    %v1196 = vpop.f32.mrb[0].mxu0
    %v1197 = vadd.f32 %v1078, %v1196
    %v1198 = vpop.f32.mrb[0].mxu0
    %1199 = vmatprep.mubr.f32.mxu0 0.0
    %1200 = vmatmul.mubr.f32.gmra.mrb[0].mxu0 %v1050
    %v1201 = vpop.f32.mrb[0].mxu0
    %v1202 = vadd.f32 %v1078, %v1201
    %v1203 = vpop.f32.mrb[0].mxu0
    %1204 = vmatprep.mubr.f32.mxu0 0.0
    %1205 = vmatmul.mubr.f32.gmra.mrb[0].mxu0 %v1051
    %v1206 = vpop.f32.mrb[0].mxu0
    %v1207 = vadd.f32 %v1078, %v1206
    %v1208 = vpop.f32.mrb[0].mxu0
    %1209 = vmatprep.mubr.f32.mxu0 0.0
    %1210 = vmatmul.mubr.f32.gmra.mrb[0].mxu0 %v1052
    %v1211 = vpop.f32.mrb[0].mxu0
    %v1212 = vadd.f32 %v1078, %v1211
    %v1213 = vpop.f32.mrb[0].mxu0
    %1214 = vmatprep.mubr.f32.mxu0 0.0
    %1215 = vmatmul.mubr.f32.gmra.mrb[0].mxu0 %v1053
    %v1216 = vpop.f32.mrb[0].mxu0
    %v1217 = vadd.f32 %v1078, %v1216
    %v1218 = vpop.f32.mrb[0].mxu0
    %1219 = vmatprep.mubr.f32.mxu0 0.0
    %1220 = vmatmul.mubr.f32.gmra.mrb[0].mxu0 %v1054
    %v1221 = vpop.f32.mrb[0].mxu0
    %v1222 = vadd.f32 %v1078, %v1221
    %v1223 = vpop.f32.mrb[0].mxu0
    %1224 = vdwg.mxu0
    %s1225 = scalar_lea.vmem %s6, 1
    %v1226 = vld [vmem:[%s1225] sm:$0x1]
    %v1228 = vlaneseq
    %v1229 = vshrl.u32 %v1228, 7
    %v1230 = vsub.s32 0, %v1229
    %v1231 = vrot.slane %v1226, %v1230
    %v1233 = vmul.f32 %v1147, %v1231
    %v1234 = vmul.f32 %v1152, %v1231
    %v1235 = vmul.f32 %v1157, %v1231
    %v1236 = vmul.f32 %v1162, %v1231
    %v1237 = vmul.f32 %v1167, %v1231
    %v1238 = vmul.f32 %v1172, %v1231
    %v1239 = vmul.f32 %v1177, %v1231
    %v1240 = vmul.f32 %v1182, %v1231
    %v1241 = vmul.f32 %v1187, %v1231
    %v1242 = vmul.f32 %v1192, %v1231
    %v1243 = vmul.f32 %v1197, %v1231
    %v1244 = vmul.f32 %v1202, %v1231
    %v1245 = vmul.f32 %v1207, %v1231
    %v1246 = vmul.f32 %v1212, %v1231
    %v1247 = vmul.f32 %v1217, %v1231
    %v1248 = vmul.f32 %v1222, %v1231
    %s1249 = scalar_lea.vmem %s7, 1
    %v1250 = vld [vmem:[%s1249] sm:$0x1]
    %v1252 = vlaneseq
    %v1253 = vshrl.u32 %v1252, 7
    %v1254 = vsub.s32 0, %v1253
    %v1255 = vrot.slane %v1250, %v1254
    %v1257 = vadd.f32 %v1233, %v1255
    %v1258 = vadd.f32 %v1234, %v1255
    %v1259 = vadd.f32 %v1235, %v1255
    %v1260 = vadd.f32 %v1236, %v1255
    %v1261 = vadd.f32 %v1237, %v1255
    %v1262 = vadd.f32 %v1238, %v1255
    %v1263 = vadd.f32 %v1239, %v1255
    %v1264 = vadd.f32 %v1240, %v1255
    %v1265 = vadd.f32 %v1241, %v1255
    %v1266 = vadd.f32 %v1242, %v1255
    %v1267 = vadd.f32 %v1243, %v1255
    %v1268 = vadd.f32 %v1244, %v1255
    %v1269 = vadd.f32 %v1245, %v1255
    %v1270 = vadd.f32 %v1246, %v1255
    %v1271 = vadd.f32 %v1247, %v1255
    %v1272 = vadd.f32 %v1248, %v1255
    %v1273 = vmax.f32 %v1257, 0.0
    %v1274 = vmax.f32 %v1258, 0.0
    %v1275 = vmax.f32 %v1259, 0.0
    %v1276 = vmax.f32 %v1260, 0.0
    %v1277 = vmax.f32 %v1261, 0.0
    %v1278 = vmax.f32 %v1262, 0.0
    %v1279 = vmax.f32 %v1263, 0.0
    %v1280 = vmax.f32 %v1264, 0.0
    %v1281 = vmax.f32 %v1265, 0.0
    %v1282 = vmax.f32 %v1266, 0.0
    %v1283 = vmax.f32 %v1267, 0.0
    %v1284 = vmax.f32 %v1268, 0.0
    %v1285 = vmax.f32 %v1269, 0.0
    %v1286 = vmax.f32 %v1270, 0.0
    %v1287 = vmax.f32 %v1271, 0.0
    %v1288 = vmax.f32 %v1272, 0.0
    %1289 = vmatprep.subr.mxu0 0.0
    %1290 = vmatpush1.msra.mxu0 %v1273
    %1291 = vmatprep.subr.mxu0 0.0
    %1292 = vmatpush1.msra.mxu0 %v1274
    %1293 = vmatprep.subr.mxu0 0.0
    %1294 = vmatpush1.msra.mxu0 %v1275
    %1295 = vmatprep.subr.mxu0 0.0
    %1296 = vmatpush1.msra.mxu0 %v1276
    %1297 = vmatprep.subr.mxu0 0.0
    %1298 = vmatpush1.msra.mxu0 %v1277
    %1299 = vmatprep.subr.mxu0 0.0
    %1300 = vmatpush1.msra.mxu0 %v1278
    %1301 = vmatprep.subr.mxu0 0.0
    %1302 = vmatpush1.msra.mxu0 %v1279
    %1303 = vmatprep.subr.mxu0 0.0
    %1304 = vmatpush1.msra.mxu0 %v1280
    %1305 = vmatprep.subr.mxu0 0.0
    %1306 = vmatpush1.msra.mxu0 %v1281
    %1307 = vmatprep.subr.mxu0 0.0
    %1308 = vmatpush1.msra.mxu0 %v1282
    %1309 = vmatprep.subr.mxu0 0.0
    %1310 = vmatpush1.msra.mxu0 %v1283
    %1311 = vmatprep.subr.mxu0 0.0
    %1312 = vmatpush1.msra.mxu0 %v1284
    %1313 = vmatprep.subr.mxu0 0.0
    %1314 = vmatpush1.msra.mxu0 %v1285
    %1315 = vmatprep.subr.mxu0 0.0
    %1316 = vmatpush1.msra.mxu0 %v1286
    %1317 = vmatprep.subr.mxu0 0.0
    %1318 = vmatpush1.msra.mxu0 %v1287
    %1319 = vmatprep.subr.mxu0 0.0
    %1320 = vmatpush1.msra.mxu0 %v1288
    %1321 = vmatprep.subr.mxu0 0.0
    %1322 = vmatpush1.msra.mxu0 0.0
    %1323 = vmatprep.subr.mxu0 0.0
    %1324 = vmatpush1.msra.mxu0 0.0
    %1325 = vmatprep.subr.mxu0 0.0
    %1326 = vmatpush1.msra.mxu0 0.0
    %1327 = vmatprep.subr.mxu0 0.0
    %1328 = vmatpush1.msra.mxu0 0.0
    %1329 = vmatprep.subr.mxu0 0.0
    %1330 = vmatpush1.msra.mxu0 0.0
    %1331 = vmatprep.subr.mxu0 0.0
    %1332 = vmatpush1.msra.mxu0 0.0
    %1333 = vmatprep.subr.mxu0 0.0
    %1334 = vmatpush1.msra.mxu0 0.0
    %1335 = vmatprep.subr.mxu0 0.0
    %1336 = vmatpush1.msra.mxu0 0.0
    %1337 = vmatprep.subr.mxu0 0.0
    %1338 = vmatpush1.msra.mxu0 0.0
    %1339 = vmatprep.subr.mxu0 0.0
    %1340 = vmatpush1.msra.mxu0 0.0
    %1341 = vmatprep.subr.mxu0 0.0
    %1342 = vmatpush1.msra.mxu0 0.0
    %1343 = vmatprep.subr.mxu0 0.0
    %1344 = vmatpush1.msra.mxu0 0.0
    %1345 = vmatprep.subr.mxu0 0.0
    %1346 = vmatpush1.msra.mxu0 0.0
    %1347 = vmatprep.subr.mxu0 0.0
    %1348 = vmatpush1.msra.mxu0 0.0
    %1349 = vmatprep.subr.mxu0 0.0
    %1350 = vmatpush1.msra.mxu0 0.0
    %1351 = vmatprep.subr.mxu0 0.0
    %1352 = vmatpush1.msra.mxu0 0.0
    %1353 = vmatprep.mubr.f32.mxu0 0.0
    %1354 = vmatmul.mubr.f32.gmra.mrb[0].mxu0 %v101
    %v1355 = vpop.f32.mrb[0].mxu0
    %v1356 = vadd.f32 0.0, %v1355
    %v1357 = vpop.f32.mrb[0].mxu0
    %1358 = vmatprep.mubr.f32.mxu0 0.0
    %1359 = vmatmul.mubr.f32.gmra.mrb[0].mxu0 %v102
    %v1360 = vpop.f32.mrb[0].mxu0
    %v1361 = vadd.f32 0.0, %v1360
    %v1362 = vpop.f32.mrb[0].mxu0
    %1363 = vmatprep.mubr.f32.mxu0 0.0
    %1364 = vmatmul.mubr.f32.gmra.mrb[0].mxu0 %v103
    %v1365 = vpop.f32.mrb[0].mxu0
    %v1366 = vadd.f32 0.0, %v1365
    %v1367 = vpop.f32.mrb[0].mxu0
    %1368 = vmatprep.mubr.f32.mxu0 0.0
    %1369 = vmatmul.mubr.f32.gmra.mrb[0].mxu0 %v104
    %v1370 = vpop.f32.mrb[0].mxu0
    %v1371 = vadd.f32 0.0, %v1370
    %v1372 = vpop.f32.mrb[0].mxu0
    %1373 = vmatprep.mubr.f32.mxu0 0.0
    %1374 = vmatmul.mubr.f32.gmra.mrb[0].mxu0 %v105
    %v1375 = vpop.f32.mrb[0].mxu0
    %v1376 = vadd.f32 0.0, %v1375
    %v1377 = vpop.f32.mrb[0].mxu0
    %1378 = vmatprep.mubr.f32.mxu0 0.0
    %1379 = vmatmul.mubr.f32.gmra.mrb[0].mxu0 %v106
    %v1380 = vpop.f32.mrb[0].mxu0
    %v1381 = vadd.f32 0.0, %v1380
    %v1382 = vpop.f32.mrb[0].mxu0
    %1383 = vmatprep.mubr.f32.mxu0 0.0
    %1384 = vmatmul.mubr.f32.gmra.mrb[0].mxu0 %v107
    %v1385 = vpop.f32.mrb[0].mxu0
    %v1386 = vadd.f32 0.0, %v1385
    %v1387 = vpop.f32.mrb[0].mxu0
    %1388 = vmatprep.mubr.f32.mxu0 0.0
    %1389 = vmatmul.mubr.f32.gmra.mrb[0].mxu0 %v108
    %v1390 = vpop.f32.mrb[0].mxu0
    %v1391 = vadd.f32 0.0, %v1390
    %v1392 = vpop.f32.mrb[0].mxu0
    %1393 = vmatprep.mubr.f32.mxu0 0.0
    %1394 = vmatmul.mubr.f32.gmra.mrb[0].mxu0 %v109
    %v1395 = vpop.f32.mrb[0].mxu0
    %v1396 = vadd.f32 0.0, %v1395
    %v1397 = vpop.f32.mrb[0].mxu0
    %1398 = vmatprep.mubr.f32.mxu0 0.0
    %1399 = vmatmul.mubr.f32.gmra.mrb[0].mxu0 %v110
    %v1400 = vpop.f32.mrb[0].mxu0
    %v1401 = vadd.f32 0.0, %v1400
    %v1402 = vpop.f32.mrb[0].mxu0
    %1403 = vmatprep.mubr.f32.mxu0 0.0
    %1404 = vmatmul.mubr.f32.gmra.mrb[0].mxu0 %v111
    %v1405 = vpop.f32.mrb[0].mxu0
    %v1406 = vadd.f32 0.0, %v1405
    %v1407 = vpop.f32.mrb[0].mxu0
    %1408 = vmatprep.mubr.f32.mxu0 0.0
    %1409 = vmatmul.mubr.f32.gmra.mrb[0].mxu0 %v112
    %v1410 = vpop.f32.mrb[0].mxu0
    %v1411 = vadd.f32 0.0, %v1410
    %v1412 = vpop.f32.mrb[0].mxu0
    %1413 = vmatprep.mubr.f32.mxu0 0.0
    %1414 = vmatmul.mubr.f32.gmra.mrb[0].mxu0 %v113
    %v1415 = vpop.f32.mrb[0].mxu0
    %v1416 = vadd.f32 0.0, %v1415
    %v1417 = vpop.f32.mrb[0].mxu0
    %1418 = vmatprep.mubr.f32.mxu0 0.0
    %1419 = vmatmul.mubr.f32.gmra.mrb[0].mxu0 %v114
    %v1420 = vpop.f32.mrb[0].mxu0
    %v1421 = vadd.f32 0.0, %v1420
    %v1422 = vpop.f32.mrb[0].mxu0
    %1423 = vmatprep.mubr.f32.mxu0 0.0
    %1424 = vmatmul.mubr.f32.gmra.mrb[0].mxu0 %v115
    %v1425 = vpop.f32.mrb[0].mxu0
    %v1426 = vadd.f32 0.0, %v1425
    %v1427 = vpop.f32.mrb[0].mxu0
    %1428 = vmatprep.mubr.f32.mxu0 0.0
    %1429 = vmatmul.mubr.f32.gmra.mrb[0].mxu0 %v116
    %v1430 = vpop.f32.mrb[0].mxu0
    %v1431 = vadd.f32 0.0, %v1430
    %v1432 = vpop.f32.mrb[0].mxu0
    %1433 = vdwg.mxu0
    %v1434 = vadd.f32 %v1273, %v1356
    %v1435 = vadd.f32 %v1274, %v1361
    %v1436 = vadd.f32 %v1275, %v1366
    %v1437 = vadd.f32 %v1276, %v1371
    %v1438 = vadd.f32 %v1277, %v1376
    %v1439 = vadd.f32 %v1278, %v1381
    %v1440 = vadd.f32 %v1279, %v1386
    %v1441 = vadd.f32 %v1280, %v1391
    %v1442 = vadd.f32 %v1281, %v1396
    %v1443 = vadd.f32 %v1282, %v1401
    %v1444 = vadd.f32 %v1283, %v1406
    %v1445 = vadd.f32 %v1284, %v1411
    %v1446 = vadd.f32 %v1285, %v1416
    %v1447 = vadd.f32 %v1286, %v1421
    %v1448 = vadd.f32 %v1287, %v1426
    %v1449 = vadd.f32 %v1288, %v1431
    %s1450 = scalar_lea.vmem [#allocation7], 256
    %v1451 = vld [vmem:[%s1450] sm:$0xff]
    %v1452 = vld [vmem:[%s1450 + $0x8] sm:$0xff]
    %v1453 = vld [vmem:[%s1450 + $0x10] sm:$0xff]
    %v1454 = vld [vmem:[%s1450 + $0x18] sm:$0xff]
    %v1455 = vld [vmem:[%s1450 + $0x20] sm:$0xff]
    %v1456 = vld [vmem:[%s1450 + $0x28] sm:$0xff]
    %v1457 = vld [vmem:[%s1450 + $0x30] sm:$0xff]
    %v1458 = vld [vmem:[%s1450 + $0x38] sm:$0xff]
    %v1459 = vld [vmem:[%s1450 + $0x40] sm:$0xff]
    %v1460 = vld [vmem:[%s1450 + $0x48] sm:$0xff]
    %v1461 = vld [vmem:[%s1450 + $0x50] sm:$0xff]
    %v1462 = vld [vmem:[%s1450 + $0x58] sm:$0xff]
    %v1463 = vld [vmem:[%s1450 + $0x60] sm:$0xff]
    %v1464 = vld [vmem:[%s1450 + $0x68] sm:$0xff]
    %v1465 = vld [vmem:[%s1450 + $0x70] sm:$0xff]
    %v1466 = vld [vmem:[%s1450 + $0x78] sm:$0xff]
    %s1467 = scalar_lea.vmem %s3, 2
    %v1468 = vld [vmem:[%s1467] sm:$0x1]
    %v1470 = vlaneseq
    %v1471 = vshrl.u32 %v1470, 7
    %v1472 = vsub.s32 0, %v1471
    %v1473 = vrot.slane %v1468, %v1472
    %1475 = vmatprep.subr.mxu0 0.0
    %1476 = vmatpush1.msra.mxu0 %v1451
    %1477 = vmatprep.subr.mxu0 0.0
    %1478 = vmatpush1.msra.mxu0 %v1452
    %1479 = vmatprep.subr.mxu0 0.0
    %1480 = vmatpush1.msra.mxu0 %v1453
    %1481 = vmatprep.subr.mxu0 0.0
    %1482 = vmatpush1.msra.mxu0 %v1454
    %1483 = vmatprep.subr.mxu0 0.0
    %1484 = vmatpush1.msra.mxu0 %v1455
    %1485 = vmatprep.subr.mxu0 0.0
    %1486 = vmatpush1.msra.mxu0 %v1456
    %1487 = vmatprep.subr.mxu0 0.0
    %1488 = vmatpush1.msra.mxu0 %v1457
    %1489 = vmatprep.subr.mxu0 0.0
    %1490 = vmatpush1.msra.mxu0 %v1458
    %1491 = vmatprep.subr.mxu0 0.0
    %1492 = vmatpush1.msra.mxu0 %v1459
    %1493 = vmatprep.subr.mxu0 0.0
    %1494 = vmatpush1.msra.mxu0 %v1460
    %1495 = vmatprep.subr.mxu0 0.0
    %1496 = vmatpush1.msra.mxu0 %v1461
    %1497 = vmatprep.subr.mxu0 0.0
    %1498 = vmatpush1.msra.mxu0 %v1462
    %1499 = vmatprep.subr.mxu0 0.0
    %1500 = vmatpush1.msra.mxu0 %v1463
    %1501 = vmatprep.subr.mxu0 0.0
    %1502 = vmatpush1.msra.mxu0 %v1464
    %1503 = vmatprep.subr.mxu0 0.0
    %1504 = vmatpush1.msra.mxu0 %v1465
    %1505 = vmatprep.subr.mxu0 0.0
    %1506 = vmatpush1.msra.mxu0 %v1466
    %1507 = vmatprep.subr.mxu0 0.0
    %1508 = vmatpush1.msra.mxu0 0.0
    %1509 = vmatprep.subr.mxu0 0.0
    %1510 = vmatpush1.msra.mxu0 0.0
    %1511 = vmatprep.subr.mxu0 0.0
    %1512 = vmatpush1.msra.mxu0 0.0
    %1513 = vmatprep.subr.mxu0 0.0
    %1514 = vmatpush1.msra.mxu0 0.0
    %1515 = vmatprep.subr.mxu0 0.0
    %1516 = vmatpush1.msra.mxu0 0.0
    %1517 = vmatprep.subr.mxu0 0.0
    %1518 = vmatpush1.msra.mxu0 0.0
    %1519 = vmatprep.subr.mxu0 0.0
    %1520 = vmatpush1.msra.mxu0 0.0
    %1521 = vmatprep.subr.mxu0 0.0
    %1522 = vmatpush1.msra.mxu0 0.0
    %1523 = vmatprep.subr.mxu0 0.0
    %1524 = vmatpush1.msra.mxu0 0.0
    %1525 = vmatprep.subr.mxu0 0.0
    %1526 = vmatpush1.msra.mxu0 0.0
    %1527 = vmatprep.subr.mxu0 0.0
    %1528 = vmatpush1.msra.mxu0 0.0
    %1529 = vmatprep.subr.mxu0 0.0
    %1530 = vmatpush1.msra.mxu0 0.0
    %1531 = vmatprep.subr.mxu0 0.0
    %1532 = vmatpush1.msra.mxu0 0.0
    %1533 = vmatprep.subr.mxu0 0.0
    %1534 = vmatpush1.msra.mxu0 0.0
    %1535 = vmatprep.subr.mxu0 0.0
    %1536 = vmatpush1.msra.mxu0 0.0
    %1537 = vmatprep.subr.mxu0 0.0
    %1538 = vmatpush1.msra.mxu0 0.0
    %1539 = vmatprep.mubr.f32.mxu0 0.0
    %1540 = vmatmul.mubr.f32.gmra.mrb[0].mxu0 %v1434
    %v1541 = vpop.f32.mrb[0].mxu0
    %v1542 = vadd.f32 %v1473, %v1541
    %v1543 = vpop.f32.mrb[0].mxu0
    %1544 = vmatprep.mubr.f32.mxu0 0.0
    %1545 = vmatmul.mubr.f32.gmra.mrb[0].mxu0 %v1435
    %v1546 = vpop.f32.mrb[0].mxu0
    %v1547 = vadd.f32 %v1473, %v1546
    %v1548 = vpop.f32.mrb[0].mxu0
    %1549 = vmatprep.mubr.f32.mxu0 0.0
    %1550 = vmatmul.mubr.f32.gmra.mrb[0].mxu0 %v1436
    %v1551 = vpop.f32.mrb[0].mxu0
    %v1552 = vadd.f32 %v1473, %v1551
    %v1553 = vpop.f32.mrb[0].mxu0
    %1554 = vmatprep.mubr.f32.mxu0 0.0
    %1555 = vmatmul.mubr.f32.gmra.mrb[0].mxu0 %v1437
    %v1556 = vpop.f32.mrb[0].mxu0
    %v1557 = vadd.f32 %v1473, %v1556
    %v1558 = vpop.f32.mrb[0].mxu0
    %1559 = vmatprep.mubr.f32.mxu0 0.0
    %1560 = vmatmul.mubr.f32.gmra.mrb[0].mxu0 %v1438
    %v1561 = vpop.f32.mrb[0].mxu0
    %v1562 = vadd.f32 %v1473, %v1561
    %v1563 = vpop.f32.mrb[0].mxu0
    %1564 = vmatprep.mubr.f32.mxu0 0.0
    %1565 = vmatmul.mubr.f32.gmra.mrb[0].mxu0 %v1439
    %v1566 = vpop.f32.mrb[0].mxu0
    %v1567 = vadd.f32 %v1473, %v1566
    %v1568 = vpop.f32.mrb[0].mxu0
    %1569 = vmatprep.mubr.f32.mxu0 0.0
    %1570 = vmatmul.mubr.f32.gmra.mrb[0].mxu0 %v1440
    %v1571 = vpop.f32.mrb[0].mxu0
    %v1572 = vadd.f32 %v1473, %v1571
    %v1573 = vpop.f32.mrb[0].mxu0
    %1574 = vmatprep.mubr.f32.mxu0 0.0
    %1575 = vmatmul.mubr.f32.gmra.mrb[0].mxu0 %v1441
    %v1576 = vpop.f32.mrb[0].mxu0
    %v1577 = vadd.f32 %v1473, %v1576
    %v1578 = vpop.f32.mrb[0].mxu0
    %1579 = vmatprep.mubr.f32.mxu0 0.0
    %1580 = vmatmul.mubr.f32.gmra.mrb[0].mxu0 %v1442
    %v1581 = vpop.f32.mrb[0].mxu0
    %v1582 = vadd.f32 %v1473, %v1581
    %v1583 = vpop.f32.mrb[0].mxu0
    %1584 = vmatprep.mubr.f32.mxu0 0.0
    %1585 = vmatmul.mubr.f32.gmra.mrb[0].mxu0 %v1443
    %v1586 = vpop.f32.mrb[0].mxu0
    %v1587 = vadd.f32 %v1473, %v1586
    %v1588 = vpop.f32.mrb[0].mxu0
    %1589 = vmatprep.mubr.f32.mxu0 0.0
    %1590 = vmatmul.mubr.f32.gmra.mrb[0].mxu0 %v1444
    %v1591 = vpop.f32.mrb[0].mxu0
    %v1592 = vadd.f32 %v1473, %v1591
    %v1593 = vpop.f32.mrb[0].mxu0
    %1594 = vmatprep.mubr.f32.mxu0 0.0
    %1595 = vmatmul.mubr.f32.gmra.mrb[0].mxu0 %v1445
    %v1596 = vpop.f32.mrb[0].mxu0
    %v1597 = vadd.f32 %v1473, %v1596
    %v1598 = vpop.f32.mrb[0].mxu0
    %1599 = vmatprep.mubr.f32.mxu0 0.0
    %1600 = vmatmul.mubr.f32.gmra.mrb[0].mxu0 %v1446
    %v1601 = vpop.f32.mrb[0].mxu0
    %v1602 = vadd.f32 %v1473, %v1601
    %v1603 = vpop.f32.mrb[0].mxu0
    %1604 = vmatprep.mubr.f32.mxu0 0.0
    %1605 = vmatmul.mubr.f32.gmra.mrb[0].mxu0 %v1447
    %v1606 = vpop.f32.mrb[0].mxu0
    %v1607 = vadd.f32 %v1473, %v1606
    %v1608 = vpop.f32.mrb[0].mxu0
    %1609 = vmatprep.mubr.f32.mxu0 0.0
    %1610 = vmatmul.mubr.f32.gmra.mrb[0].mxu0 %v1448
    %v1611 = vpop.f32.mrb[0].mxu0
    %v1612 = vadd.f32 %v1473, %v1611
    %v1613 = vpop.f32.mrb[0].mxu0
    %1614 = vmatprep.mubr.f32.mxu0 0.0
    %1615 = vmatmul.mubr.f32.gmra.mrb[0].mxu0 %v1449
    %v1616 = vpop.f32.mrb[0].mxu0
    %v1617 = vadd.f32 %v1473, %v1616
    %v1618 = vpop.f32.mrb[0].mxu0
    %1619 = vdwg.mxu0
    %v1620 = vmax.f32 %v1542, 0.0
    %v1621 = vmax.f32 %v1547, 0.0
    %v1622 = vmax.f32 %v1552, 0.0
    %v1623 = vmax.f32 %v1557, 0.0
    %v1624 = vmax.f32 %v1562, 0.0
    %v1625 = vmax.f32 %v1567, 0.0
    %v1626 = vmax.f32 %v1572, 0.0
    %v1627 = vmax.f32 %v1577, 0.0
    %v1628 = vmax.f32 %v1582, 0.0
    %v1629 = vmax.f32 %v1587, 0.0
    %v1630 = vmax.f32 %v1592, 0.0
    %v1631 = vmax.f32 %v1597, 0.0
    %v1632 = vmax.f32 %v1602, 0.0
    %v1633 = vmax.f32 %v1607, 0.0
    %v1634 = vmax.f32 %v1612, 0.0
    %v1635 = vmax.f32 %v1617, 0.0
    %s1636 = scalar_lea.vmem [#allocation8], 256
    %v1637 = vld [vmem:[%s1636] sm:$0xff]
    %v1638 = vld [vmem:[%s1636 + $0x8] sm:$0xff]
    %v1639 = vld [vmem:[%s1636 + $0x10] sm:$0xff]
    %v1640 = vld [vmem:[%s1636 + $0x18] sm:$0xff]
    %v1641 = vld [vmem:[%s1636 + $0x20] sm:$0xff]
    %v1642 = vld [vmem:[%s1636 + $0x28] sm:$0xff]
    %v1643 = vld [vmem:[%s1636 + $0x30] sm:$0xff]
    %v1644 = vld [vmem:[%s1636 + $0x38] sm:$0xff]
    %v1645 = vld [vmem:[%s1636 + $0x40] sm:$0xff]
    %v1646 = vld [vmem:[%s1636 + $0x48] sm:$0xff]
    %v1647 = vld [vmem:[%s1636 + $0x50] sm:$0xff]
    %v1648 = vld [vmem:[%s1636 + $0x58] sm:$0xff]
    %v1649 = vld [vmem:[%s1636 + $0x60] sm:$0xff]
    %v1650 = vld [vmem:[%s1636 + $0x68] sm:$0xff]
    %v1651 = vld [vmem:[%s1636 + $0x70] sm:$0xff]
    %v1652 = vld [vmem:[%s1636 + $0x78] sm:$0xff]
    %s1653 = scalar_lea.vmem %s5, 2
    %v1654 = vld [vmem:[%s1653] sm:$0x1]
    %v1656 = vlaneseq
    %v1657 = vshrl.u32 %v1656, 7
    %v1658 = vsub.s32 0, %v1657
    %v1659 = vrot.slane %v1654, %v1658
    %1661 = vmatprep.subr.mxu0 0.0
    %1662 = vmatpush1.msra.mxu0 %v1637
    %1663 = vmatprep.subr.mxu0 0.0
    %1664 = vmatpush1.msra.mxu0 %v1638
    %1665 = vmatprep.subr.mxu0 0.0
    %1666 = vmatpush1.msra.mxu0 %v1639
    %1667 = vmatprep.subr.mxu0 0.0
    %1668 = vmatpush1.msra.mxu0 %v1640
    %1669 = vmatprep.subr.mxu0 0.0
    %1670 = vmatpush1.msra.mxu0 %v1641
    %1671 = vmatprep.subr.mxu0 0.0
    %1672 = vmatpush1.msra.mxu0 %v1642
    %1673 = vmatprep.subr.mxu0 0.0
    %1674 = vmatpush1.msra.mxu0 %v1643
    %1675 = vmatprep.subr.mxu0 0.0
    %1676 = vmatpush1.msra.mxu0 %v1644
    %1677 = vmatprep.subr.mxu0 0.0
    %1678 = vmatpush1.msra.mxu0 %v1645
    %1679 = vmatprep.subr.mxu0 0.0
    %1680 = vmatpush1.msra.mxu0 %v1646
    %1681 = vmatprep.subr.mxu0 0.0
    %1682 = vmatpush1.msra.mxu0 %v1647
    %1683 = vmatprep.subr.mxu0 0.0
    %1684 = vmatpush1.msra.mxu0 %v1648
    %1685 = vmatprep.subr.mxu0 0.0
    %1686 = vmatpush1.msra.mxu0 %v1649
    %1687 = vmatprep.subr.mxu0 0.0
    %1688 = vmatpush1.msra.mxu0 %v1650
    %1689 = vmatprep.subr.mxu0 0.0
    %1690 = vmatpush1.msra.mxu0 %v1651
    %1691 = vmatprep.subr.mxu0 0.0
    %1692 = vmatpush1.msra.mxu0 %v1652
    %1693 = vmatprep.subr.mxu0 0.0
    %1694 = vmatpush1.msra.mxu0 0.0
    %1695 = vmatprep.subr.mxu0 0.0
    %1696 = vmatpush1.msra.mxu0 0.0
    %1697 = vmatprep.subr.mxu0 0.0
    %1698 = vmatpush1.msra.mxu0 0.0
    %1699 = vmatprep.subr.mxu0 0.0
    %1700 = vmatpush1.msra.mxu0 0.0
    %1701 = vmatprep.subr.mxu0 0.0
    %1702 = vmatpush1.msra.mxu0 0.0
    %1703 = vmatprep.subr.mxu0 0.0
    %1704 = vmatpush1.msra.mxu0 0.0
    %1705 = vmatprep.subr.mxu0 0.0
    %1706 = vmatpush1.msra.mxu0 0.0
    %1707 = vmatprep.subr.mxu0 0.0
    %1708 = vmatpush1.msra.mxu0 0.0
    %1709 = vmatprep.subr.mxu0 0.0
    %1710 = vmatpush1.msra.mxu0 0.0
    %1711 = vmatprep.subr.mxu0 0.0
    %1712 = vmatpush1.msra.mxu0 0.0
    %1713 = vmatprep.subr.mxu0 0.0
    %1714 = vmatpush1.msra.mxu0 0.0
    %1715 = vmatprep.subr.mxu0 0.0
    %1716 = vmatpush1.msra.mxu0 0.0
    %1717 = vmatprep.subr.mxu0 0.0
    %1718 = vmatpush1.msra.mxu0 0.0
    %1719 = vmatprep.subr.mxu0 0.0
    %1720 = vmatpush1.msra.mxu0 0.0
    %1721 = vmatprep.subr.mxu0 0.0
    %1722 = vmatpush1.msra.mxu0 0.0
    %1723 = vmatprep.subr.mxu0 0.0
    %1724 = vmatpush1.msra.mxu0 0.0
    %1725 = vmatprep.mubr.f32.mxu0 0.0
    %1726 = vmatmul.mubr.f32.gmra.mrb[0].mxu0 %v1620
    %v1727 = vpop.f32.mrb[0].mxu0
    %v1728 = vadd.f32 %v1659, %v1727
    %v1729 = vpop.f32.mrb[0].mxu0
    %1730 = vmatprep.mubr.f32.mxu0 0.0
    %1731 = vmatmul.mubr.f32.gmra.mrb[0].mxu0 %v1621
    %v1732 = vpop.f32.mrb[0].mxu0
    %v1733 = vadd.f32 %v1659, %v1732
    %v1734 = vpop.f32.mrb[0].mxu0
    %1735 = vmatprep.mubr.f32.mxu0 0.0
    %1736 = vmatmul.mubr.f32.gmra.mrb[0].mxu0 %v1622
    %v1737 = vpop.f32.mrb[0].mxu0
    %v1738 = vadd.f32 %v1659, %v1737
    %v1739 = vpop.f32.mrb[0].mxu0
    %1740 = vmatprep.mubr.f32.mxu0 0.0
    %1741 = vmatmul.mubr.f32.gmra.mrb[0].mxu0 %v1623
    %v1742 = vpop.f32.mrb[0].mxu0
    %v1743 = vadd.f32 %v1659, %v1742
    %v1744 = vpop.f32.mrb[0].mxu0
    %1745 = vmatprep.mubr.f32.mxu0 0.0
    %1746 = vmatmul.mubr.f32.gmra.mrb[0].mxu0 %v1624
    %v1747 = vpop.f32.mrb[0].mxu0
    %v1748 = vadd.f32 %v1659, %v1747
    %v1749 = vpop.f32.mrb[0].mxu0
    %1750 = vmatprep.mubr.f32.mxu0 0.0
    %1751 = vmatmul.mubr.f32.gmra.mrb[0].mxu0 %v1625
    %v1752 = vpop.f32.mrb[0].mxu0
    %v1753 = vadd.f32 %v1659, %v1752
    %v1754 = vpop.f32.mrb[0].mxu0
    %1755 = vmatprep.mubr.f32.mxu0 0.0
    %1756 = vmatmul.mubr.f32.gmra.mrb[0].mxu0 %v1626
    %v1757 = vpop.f32.mrb[0].mxu0
    %v1758 = vadd.f32 %v1659, %v1757
    %v1759 = vpop.f32.mrb[0].mxu0
    %1760 = vmatprep.mubr.f32.mxu0 0.0
    %1761 = vmatmul.mubr.f32.gmra.mrb[0].mxu0 %v1627
    %v1762 = vpop.f32.mrb[0].mxu0
    %v1763 = vadd.f32 %v1659, %v1762
    %v1764 = vpop.f32.mrb[0].mxu0
    %1765 = vmatprep.mubr.f32.mxu0 0.0
    %1766 = vmatmul.mubr.f32.gmra.mrb[0].mxu0 %v1628
    %v1767 = vpop.f32.mrb[0].mxu0
    %v1768 = vadd.f32 %v1659, %v1767
    %v1769 = vpop.f32.mrb[0].mxu0
    %1770 = vmatprep.mubr.f32.mxu0 0.0
    %1771 = vmatmul.mubr.f32.gmra.mrb[0].mxu0 %v1629
    %v1772 = vpop.f32.mrb[0].mxu0
    %v1773 = vadd.f32 %v1659, %v1772
    %v1774 = vpop.f32.mrb[0].mxu0
    %1775 = vmatprep.mubr.f32.mxu0 0.0
    %1776 = vmatmul.mubr.f32.gmra.mrb[0].mxu0 %v1630
    %v1777 = vpop.f32.mrb[0].mxu0
    %v1778 = vadd.f32 %v1659, %v1777
    %v1779 = vpop.f32.mrb[0].mxu0
    %1780 = vmatprep.mubr.f32.mxu0 0.0
    %1781 = vmatmul.mubr.f32.gmra.mrb[0].mxu0 %v1631
    %v1782 = vpop.f32.mrb[0].mxu0
    %v1783 = vadd.f32 %v1659, %v1782
    %v1784 = vpop.f32.mrb[0].mxu0
    %1785 = vmatprep.mubr.f32.mxu0 0.0
    %1786 = vmatmul.mubr.f32.gmra.mrb[0].mxu0 %v1632
    %v1787 = vpop.f32.mrb[0].mxu0
    %v1788 = vadd.f32 %v1659, %v1787
    %v1789 = vpop.f32.mrb[0].mxu0
    %1790 = vmatprep.mubr.f32.mxu0 0.0
    %1791 = vmatmul.mubr.f32.gmra.mrb[0].mxu0 %v1633
    %v1792 = vpop.f32.mrb[0].mxu0
    %v1793 = vadd.f32 %v1659, %v1792
    %v1794 = vpop.f32.mrb[0].mxu0
    %1795 = vmatprep.mubr.f32.mxu0 0.0
    %1796 = vmatmul.mubr.f32.gmra.mrb[0].mxu0 %v1634
    %v1797 = vpop.f32.mrb[0].mxu0
    %v1798 = vadd.f32 %v1659, %v1797
    %v1799 = vpop.f32.mrb[0].mxu0
    %1800 = vmatprep.mubr.f32.mxu0 0.0
    %1801 = vmatmul.mubr.f32.gmra.mrb[0].mxu0 %v1635
    %v1802 = vpop.f32.mrb[0].mxu0
    %v1803 = vadd.f32 %v1659, %v1802
    %v1804 = vpop.f32.mrb[0].mxu0
    %1805 = vdwg.mxu0
    %s1806 = scalar_lea.vmem %s6, 2
    %v1807 = vld [vmem:[%s1806] sm:$0x1]
    %v1809 = vlaneseq
    %v1810 = vshrl.u32 %v1809, 7
    %v1811 = vsub.s32 0, %v1810
    %v1812 = vrot.slane %v1807, %v1811
    %v1814 = vmul.f32 %v1728, %v1812
    %v1815 = vmul.f32 %v1733, %v1812
    %v1816 = vmul.f32 %v1738, %v1812
    %v1817 = vmul.f32 %v1743, %v1812
    %v1818 = vmul.f32 %v1748, %v1812
    %v1819 = vmul.f32 %v1753, %v1812
    %v1820 = vmul.f32 %v1758, %v1812
    %v1821 = vmul.f32 %v1763, %v1812
    %v1822 = vmul.f32 %v1768, %v1812
    %v1823 = vmul.f32 %v1773, %v1812
    %v1824 = vmul.f32 %v1778, %v1812
    %v1825 = vmul.f32 %v1783, %v1812
    %v1826 = vmul.f32 %v1788, %v1812
    %v1827 = vmul.f32 %v1793, %v1812
    %v1828 = vmul.f32 %v1798, %v1812
    %v1829 = vmul.f32 %v1803, %v1812
    %s1830 = scalar_lea.vmem %s7, 2
    %v1831 = vld [vmem:[%s1830] sm:$0x1]
    %v1833 = vlaneseq
    %v1834 = vshrl.u32 %v1833, 7
    %v1835 = vsub.s32 0, %v1834
    %v1836 = vrot.slane %v1831, %v1835
    %v1838 = vadd.f32 %v1814, %v1836
    %v1839 = vadd.f32 %v1815, %v1836
    %v1840 = vadd.f32 %v1816, %v1836
    %v1841 = vadd.f32 %v1817, %v1836
    %v1842 = vadd.f32 %v1818, %v1836
    %v1843 = vadd.f32 %v1819, %v1836
    %v1844 = vadd.f32 %v1820, %v1836
    %v1845 = vadd.f32 %v1821, %v1836
    %v1846 = vadd.f32 %v1822, %v1836
    %v1847 = vadd.f32 %v1823, %v1836
    %v1848 = vadd.f32 %v1824, %v1836
    %v1849 = vadd.f32 %v1825, %v1836
    %v1850 = vadd.f32 %v1826, %v1836
    %v1851 = vadd.f32 %v1827, %v1836
    %v1852 = vadd.f32 %v1828, %v1836
    %v1853 = vadd.f32 %v1829, %v1836
    %1854 = vst [vmem:[#allocation10] sm:$0xff] %v1838
    %1855 = vst [vmem:[#allocation10 + $0x8] sm:$0xff] %v1839
    %1856 = vst [vmem:[#allocation10 + $0x10] sm:$0xff] %v1840
    %1857 = vst [vmem:[#allocation10 + $0x18] sm:$0xff] %v1841
    %1858 = vst [vmem:[#allocation10 + $0x20] sm:$0xff] %v1842
    %1859 = vst [vmem:[#allocation10 + $0x28] sm:$0xff] %v1843
    %1860 = vst [vmem:[#allocation10 + $0x30] sm:$0xff] %v1844
    %1861 = vst [vmem:[#allocation10 + $0x38] sm:$0xff] %v1845
    %1862 = vst [vmem:[#allocation10 + $0x40] sm:$0xff] %v1846
    %1863 = vst [vmem:[#allocation10 + $0x48] sm:$0xff] %v1847
    %1864 = vst [vmem:[#allocation10 + $0x50] sm:$0xff] %v1848
    %1865 = vst [vmem:[#allocation10 + $0x58] sm:$0xff] %v1849
    %1866 = vst [vmem:[#allocation10 + $0x60] sm:$0xff] %v1850
    %1867 = vst [vmem:[#allocation10 + $0x68] sm:$0xff] %v1851
    %1868 = vst [vmem:[#allocation10 + $0x70] sm:$0xff] %v1852
    %1869 = vst [vmem:[#allocation10 + $0x78] sm:$0xff] %v1853
    // Predicated region
    $region50: #{tpu_custom_call.1} parent=1 // pred_check
      _
    $region51: #{tpu_custom_call.1} parent=1 // pred_check_branch
      %1871 = sbr.rel (0) target = $region53
    $region52: #{tpu_custom_call.1} parent=1 // pred_region
      %s1873 = ssub.s32 2048, 2048
      %1874 = vsyncadd [#allocation4], %s1873
      %s1875 = sshll.u32 [#allocation10], 4
      %s1876 = int_to_ptr.vmem [resolvable:$true] %s1875
      %1881 = dma.vmem_to_hbm [thread:$0]  %s1876, 2048, %s8, [#allocation4], 128, 128, 8
    $region53: #{tpu_custom_call.1} parent=1 // pred_fallthru
      _
    // Predicated region
    $region54: #{tpu_custom_call.1} parent=1 // pred_check
      _
    $region55: #{tpu_custom_call.1} parent=1 // pred_check_branch
      %1883 = sbr.rel (0) target = $region57
    $region56: #{tpu_custom_call.1} parent=1 // pred_region
      %1884 = dma.done [#allocation4], 2048
    $region57: #{tpu_custom_call.1} parent=1 // pred_fallthru
      _
    %1885 = vsyncpa [#allocation3], 1
    %1886 = vsyncpa [#allocation6], 1
    %1887 = vsyncpa [#allocation9], 1
    %1888 = vsyncpa [#allocation4], 1

</llo_original>
